<compile_context>
chip_gen: v5e
topology: v5e:2x2
jax: 0.10.0
libtpu: 0.0.40
codegen_flags: <defaults>
</compile_context>

<pallas_src>
import functools

import jax
import jax.numpy as jnp
from jax import lax
from jax.experimental import pallas as pl
from jax.experimental.pallas import tpu as pltpu

HIDDEN = 32  # hidden width of every layer


# ----------------------------------------------------------------------------
# Kernel: all 4 Linear layers + 3 Tanh fused, batch on the 128-lane axis.
#   x_ref   : (2, tile_n)   input points (t, x) feature-major
#   w1a/w1b : (32, 1)       columns of W1 (layer 1 as VPU MACs)
#   b1..b3  : (32, 1)       biases, broadcast over lanes
#   w2, w3  : (32, 32)      hidden weights (PyTorch [out, in])
#   w4c     : (32, 1)       W4^T column (layer 4 as VPU mult + sublane reduce)
#   b4      : (1, 1)
#   o_ref   : (1, tile_n)   lane-dense output row
# ----------------------------------------------------------------------------
def mlp_kernel(x_ref, w1a_ref, w1b_ref, b1_ref, w2_ref, b2_ref,
               w3_ref, b3_ref, w4_ref, b4_ref, o_ref, *, fast_math):
    x = x_ref[...]                                    # (2, tile_n)
    w1a, w1b = w1a_ref[...], w1b_ref[...]             # (32, 1) each
    b1, b2, b3 = b1_ref[...], b2_ref[...], b3_ref[...]
    w4c, b4 = w4_ref[...], b4_ref[...]

    # Layer 1 (2 -> 32): K=2 contraction as two VPU multiply-adds (no MXU).
    z1 = w1a * x[0:1, :] + w1b * x[1:2, :] + b1       # (32, tile_n) f32

    if fast_math:
        # bf16 tanh (EUP) + single-pass bf16 MXU dots, f32 accumulation.
        # Use on v6e/v7x only; keep fast_math=False on v5e.
        h = jnp.tanh(z1.astype(jnp.bfloat16))                       # bf16
        w2 = w2_ref[...].astype(jnp.bfloat16)
        z2 = jnp.dot(w2, h, preferred_element_type=jnp.float32) + b2
        h = jnp.tanh(z2.astype(jnp.bfloat16))
        w3 = w3_ref[...].astype(jnp.bfloat16)
        z3 = jnp.dot(w3, h, preferred_element_type=jnp.float32) + b3
        h = jnp.tanh(z3.astype(jnp.bfloat16)).astype(jnp.float32)
    else:
        # Strict f32 path (matches the PyTorch reference bit-for-bit-ish).
        h = jnp.tanh(z1)
        h = jnp.tanh(jnp.dot(w2_ref[...], h,
                             preferred_element_type=jnp.float32,
                             precision=lax.Precision.HIGHEST) + b2)
        h = jnp.tanh(jnp.dot(w3_ref[...], h,
                             preferred_element_type=jnp.float32,
                             precision=lax.Precision.HIGHEST) + b3)

    # Layer 4 (32 -> 1): VPU multiply + sublane reduce (XLU), lane-dense store.
    o_ref[...] = (jnp.sum(w4c * h, axis=0, keepdims=True) + b4).astype(o_ref.dtype)


# ----------------------------------------------------------------------------
# Param prep: PyTorch-native [out, in] weights -> per-layer resident arrays.
# ----------------------------------------------------------------------------
def _prep_params(params):
    f32 = jnp.float32
    w1 = params["w1"].astype(f32)                       # (32, 2)
    return (
        w1[:, 0:1],                                     # w1a (32, 1)
        w1[:, 1:2],                                     # w1b (32, 1)
        params["b1"].astype(f32).reshape(HIDDEN, 1),    # b1
        params["w2"].astype(f32),                       # (32, 32)
        params["b2"].astype(f32).reshape(HIDDEN, 1),
        params["w3"].astype(f32),                       # (32, 32)
        params["b3"].astype(f32).reshape(HIDDEN, 1),
        params["w4"].astype(f32).T,                     # (1, 32) -> (32, 1)
        params["b4"].astype(f32).reshape(1, 1),
    )


def _round_up(a, b):
    return ((a + b - 1) // b) * b


def mlp_forward_fm(x_fm, params, *, tile_n=4096, fast_math=False):
    """x_fm: (2, N) float32 feature-major input. Returns (1, N) float32.

    For v7x, choose tile_n so that N // tile_n is even and >= 4 (>= 2 grid
    steps per TensorCore); for large PINN batches the default tile_n=4096
    already gives that while keeping per-step overhead amortized.
    """
    din, n = x_fm.shape
    assert din == 2

    # Pad batch to a lane-aligned tile grid; padded lanes are sliced off below.
    n_pad = _round_up(n, 128)
    tile = max(128, min((tile_n // 128) * 128, n_pad))
    n_pad = _round_up(n_pad, tile)
    if n_pad != n:
        x_fm = jnp.pad(x_fm, ((0, 0), (0, n_pad - n)))

    const = lambda i: (0, 0)
    args = _prep_params(params)

    grid_spec = pltpu.PrefetchScalarGridSpec(
        num_scalar_prefetch=0,
        grid=(n_pad // tile,),
        in_specs=[
            pl.BlockSpec((2, tile), lambda i: (0, i)),       # x, tiled over batch
            pl.BlockSpec((HIDDEN, 1), const),                # w1a   (resident)
            pl.BlockSpec((HIDDEN, 1), const),                # w1b
            pl.BlockSpec((HIDDEN, 1), const),                # b1
            pl.BlockSpec((HIDDEN, HIDDEN), const),           # w2
            pl.BlockSpec((HIDDEN, 1), const),                # b2
            pl.BlockSpec((HIDDEN, HIDDEN), const),           # w3
            pl.BlockSpec((HIDDEN, 1), const),                # b3
            pl.BlockSpec((HIDDEN, 1), const),                # w4 column
            pl.BlockSpec((1, 1), const),                     # b4
        ],
        out_specs=pl.BlockSpec((1, tile), lambda i: (0, i)),  # lane-dense output
    )

    # flops/point: 2*2*32 + 2*32*32 + 2*32*32 + 2*32 = 4288 ; 3*32 tanh/point.
    n_weight_bytes = 4 * (2 * HIDDEN * HIDDEN + 6 * HIDDEN + 1)
    cost = pl.CostEstimate(
        flops=4288 * n_pad,
        transcendentals=96 * n_pad,
        bytes_accessed=12 * n_pad + n_weight_bytes,
    )

    out_fm = pl.pallas_call(
        functools.partial(mlp_kernel, fast_math=fast_math),
        out_shape=jax.ShapeDtypeStruct((1, n_pad), jnp.float32),
        grid_spec=grid_spec,
        compiler_params=pltpu.CompilerParams(
            dimension_semantics=("parallel",)),   # shards grid over v7x's 2 TCs
        cost_estimate=cost,
    )(x_fm, *args)

    return out_fm[:, :n]


def mlp_forward(x, params, *, tile_n=4096, fast_math=False):
    """x: (N, 2) float32 (PyTorch convention). Returns (N, 1) float32.

    Prefer producing points feature-major upstream and calling mlp_forward_fm
    directly so the (N,2)->(2,N) relayout fuses into the producer instead of
    being a standalone HBM pass.
    """
    n, din = x.shape
    assert din == 2
    out_fm = mlp_forward_fm(x.T, params, tile_n=tile_n, fast_math=fast_math)
    return out_fm.T                                      # (N, 1)


# ----------------------------------------------------------------------------
# Deterministic init mimicking torch.nn.Linear default U(-k, k), k = 1/sqrt(fan_in).
# Weights stored PyTorch-native [out, in]; biases (out,).
# ----------------------------------------------------------------------------
def init_params(key):
    sizes = [(32, 2), (32, 32), (32, 32), (1, 32)]       # (out, in)
    params = {}
    for idx, (fan_out, fan_in) in enumerate(sizes, start=1):
        key, kw, kb = jax.random.split(key, 3)
        bound = 1.0 / (fan_in ** 0.5)
        params[f"w{idx}"] = jax.random.uniform(
            kw, (fan_out, fan_in), jnp.float32, -bound, bound)
        params[f"b{idx}"] = jax.random.uniform(
            kb, (fan_out,), jnp.float32, -bound, bound)
    return params


def mlp_reference(x, params):
    h = jnp.tanh(x @ params["w1"].T + params["b1"])
    h = jnp.tanh(h @ params["w2"].T + params["b2"])
    h = jnp.tanh(h @ params["w3"].T + params["b3"])
    return h @ params["w4"].T + params["b4"]


if __name__ == "__main__":
    key = jax.random.PRNGKey(0)
    key, kx = jax.random.split(key)
    params = init_params(key)

    # Feature-major batch of (t, x) PINN points produced directly in (2, N)
    # layout — no standalone transpose pass.  tile_n=512 here gives grid=(4,):
    # even and >= 2 steps per TensorCore on v7x.  For large PINN batches use
    # the default tile_n=4096.
    N = 2048
    x_fm = jax.random.normal(kx, (2, N), dtype=jnp.float32)

    out = jax.block_until_ready(mlp_forward_fm(x_fm, params, tile_n=512))
    ref = mlp_reference(x_fm.T, params)
    assert out.shape == (1, N)
    assert jnp.allclose(out.T, ref, atol=1e-5, rtol=1e-5)

    # Ragged batch (padding path) through the (N, 2) PyTorch-convention wrapper.
    x_rag = jax.random.normal(jax.random.PRNGKey(1), (1000, 2), dtype=jnp.float32)
    out_rag = jax.block_until_ready(mlp_forward(x_rag, params, tile_n=512))
    ref_rag = mlp_reference(x_rag, params)
    assert out_rag.shape == (1000, 1)
    assert jnp.allclose(out_rag, ref_rag, atol=1e-5, rtol=1e-5)

    # Optional fast-math path (bf16 MXU pass + bf16 tanh) — perf option for
    # v6e/v7x; validated here only to a loose tolerance.
    out_fast = jax.block_until_ready(
        mlp_forward_fm(x_fm, params, tile_n=512, fast_math=True))
    assert jnp.allclose(out_fast.T, ref, atol=1e-1, rtol=1e-1)

    print("KERNEL_OK")
</pallas_src>

<mosaic_0001>
module attributes {stable_mosaic.version = 11 : i64} {
  func.func @mlp_kernel(%arg0: i32, %arg1: memref<2x512xf32, #tpu.memory_space<vmem>>, %arg2: memref<32x1xf32, #tpu.memory_space<vmem>>, %arg3: memref<32x1xf32, #tpu.memory_space<vmem>>, %arg4: memref<32x1xf32, #tpu.memory_space<vmem>>, %arg5: memref<32x32xf32, #tpu.memory_space<vmem>>, %arg6: memref<32x1xf32, #tpu.memory_space<vmem>>, %arg7: memref<32x32xf32, #tpu.memory_space<vmem>>, %arg8: memref<32x1xf32, #tpu.memory_space<vmem>>, %arg9: memref<32x1xf32, #tpu.memory_space<vmem>>, %arg10: memref<1x1xf32, #tpu.memory_space<vmem>>, %arg11: memref<1x512xf32, #tpu.memory_space<vmem>>) attributes {dimension_semantics = [#tpu.dimension_semantics<parallel>], iteration_bounds = array<i64: 4>, scalar_prefetch = 0 : i64, scratch_operands = 0 : i64, tpu.core_type = #tpu.core_type<tc>, window_params = [{transform_indices = @transform_0, window_bounds = array<i64: 2, 512>}, {pipeline_mode = #tpu.pipeline_mode<synchronous>, transform_indices = @transform_1, window_bounds = array<i64: 32, 1>}, {pipeline_mode = #tpu.pipeline_mode<synchronous>, transform_indices = @transform_2, window_bounds = array<i64: 32, 1>}, {pipeline_mode = #tpu.pipeline_mode<synchronous>, transform_indices = @transform_3, window_bounds = array<i64: 32, 1>}, {pipeline_mode = #tpu.pipeline_mode<synchronous>, transform_indices = @transform_4, window_bounds = array<i64: 32, 32>}, {pipeline_mode = #tpu.pipeline_mode<synchronous>, transform_indices = @transform_5, window_bounds = array<i64: 32, 1>}, {pipeline_mode = #tpu.pipeline_mode<synchronous>, transform_indices = @transform_6, window_bounds = array<i64: 32, 32>}, {pipeline_mode = #tpu.pipeline_mode<synchronous>, transform_indices = @transform_7, window_bounds = array<i64: 32, 1>}, {pipeline_mode = #tpu.pipeline_mode<synchronous>, transform_indices = @transform_8, window_bounds = array<i64: 32, 1>}, {pipeline_mode = #tpu.pipeline_mode<synchronous>, transform_indices = @transform_9, window_bounds = array<i64: 1, 1>}, {transform_indices = @transform_10, window_bounds = array<i64: 1, 512>}]} {
    %c0 = arith.constant 0 : index
    %c0_0 = arith.constant 0 : index
    %0 = vector.load %arg1[%c0, %c0_0] : memref<2x512xf32, #tpu.memory_space<vmem>>, vector<2x512xf32>
    %c0_1 = arith.constant 0 : index
    %c0_2 = arith.constant 0 : index
    %1 = vector.load %arg2[%c0_1, %c0_2] : memref<32x1xf32, #tpu.memory_space<vmem>>, vector<32x1xf32>
    %c0_3 = arith.constant 0 : index
    %c0_4 = arith.constant 0 : index
    %2 = vector.load %arg3[%c0_3, %c0_4] : memref<32x1xf32, #tpu.memory_space<vmem>>, vector<32x1xf32>
    %c0_5 = arith.constant 0 : index
    %c0_6 = arith.constant 0 : index
    %3 = vector.load %arg4[%c0_5, %c0_6] : memref<32x1xf32, #tpu.memory_space<vmem>>, vector<32x1xf32>
    %c0_7 = arith.constant 0 : index
    %c0_8 = arith.constant 0 : index
    %4 = vector.load %arg6[%c0_7, %c0_8] : memref<32x1xf32, #tpu.memory_space<vmem>>, vector<32x1xf32>
    %c0_9 = arith.constant 0 : index
    %c0_10 = arith.constant 0 : index
    %5 = vector.load %arg8[%c0_9, %c0_10] : memref<32x1xf32, #tpu.memory_space<vmem>>, vector<32x1xf32>
    %c0_11 = arith.constant 0 : index
    %c0_12 = arith.constant 0 : index
    %6 = vector.load %arg9[%c0_11, %c0_12] : memref<32x1xf32, #tpu.memory_space<vmem>>, vector<32x1xf32>
    %c0_13 = arith.constant 0 : index
    %c0_14 = arith.constant 0 : index
    %7 = vector.load %arg10[%c0_13, %c0_14] : memref<1x1xf32, #tpu.memory_space<vmem>>, vector<1x1xf32>
    %8 = vector.extract_strided_slice %0 {offsets = [0, 0], sizes = [1, 512], strides = [1, 1]} : vector<2x512xf32> to vector<1x512xf32>
    %9 = vector.broadcast %1 : vector<32x1xf32> to vector<32x512xf32>
    %10 = vector.broadcast %8 : vector<1x512xf32> to vector<32x512xf32>
    %11 = arith.mulf %9, %10 : vector<32x512xf32>
    %12 = vector.extract_strided_slice %0 {offsets = [1, 0], sizes = [1, 512], strides = [1, 1]} : vector<2x512xf32> to vector<1x512xf32>
    %13 = vector.broadcast %2 : vector<32x1xf32> to vector<32x512xf32>
    %14 = vector.broadcast %12 : vector<1x512xf32> to vector<32x512xf32>
    %15 = arith.mulf %13, %14 : vector<32x512xf32>
    %16 = arith.addf %11, %15 : vector<32x512xf32>
    %17 = vector.broadcast %3 : vector<32x1xf32> to vector<32x512xf32>
    %18 = arith.addf %16, %17 : vector<32x512xf32>
    %19 = math.tanh %18 : vector<32x512xf32>
    %c0_15 = arith.constant 0 : index
    %c0_16 = arith.constant 0 : index
    %20 = vector.load %arg5[%c0_15, %c0_16] : memref<32x32xf32, #tpu.memory_space<vmem>>, vector<32x32xf32>
    %cst = arith.constant dense<0.000000e+00> : vector<32x512xf32>
    %21 = tpu.matmul %20, %19, %cst {dimension_numbers = #tpu.dot_dimension_numbers<[1], [0], [0], [1], [0, 0, 1, 1], [], []>, precision = #tpu.contract_precision<fp32>} : vector<32x32xf32>, vector<32x512xf32>, vector<32x512xf32> -> vector<32x512xf32>
    %22 = vector.broadcast %4 : vector<32x1xf32> to vector<32x512xf32>
    %23 = arith.addf %21, %22 : vector<32x512xf32>
    %24 = math.tanh %23 : vector<32x512xf32>
    %c0_17 = arith.constant 0 : index
    %c0_18 = arith.constant 0 : index
    %25 = vector.load %arg7[%c0_17, %c0_18] : memref<32x32xf32, #tpu.memory_space<vmem>>, vector<32x32xf32>
    %cst_19 = arith.constant dense<0.000000e+00> : vector<32x512xf32>
    %26 = tpu.matmul %25, %24, %cst_19 {dimension_numbers = #tpu.dot_dimension_numbers<[1], [0], [0], [1], [0, 0, 1, 1], [], []>, precision = #tpu.contract_precision<fp32>} : vector<32x32xf32>, vector<32x512xf32>, vector<32x512xf32> -> vector<32x512xf32>
    %27 = vector.broadcast %5 : vector<32x1xf32> to vector<32x512xf32>
    %28 = arith.addf %26, %27 : vector<32x512xf32>
    %29 = math.tanh %28 : vector<32x512xf32>
    %30 = vector.broadcast %6 : vector<32x1xf32> to vector<32x512xf32>
    %31 = arith.mulf %30, %29 : vector<32x512xf32>
    %cst_20 = arith.constant dense<0.000000e+00> : vector<512xf32>
    %32 = vector.multi_reduction <add>, %31, %cst_20 [0] : vector<32x512xf32> to vector<512xf32>
    %33 = vector.shape_cast %32 : vector<512xf32> to vector<1x512xf32>
    %34 = vector.broadcast %7 : vector<1x1xf32> to vector<1x512xf32>
    %35 = arith.addf %33, %34 : vector<1x512xf32>
    %c0_21 = arith.constant 0 : index
    %c0_22 = arith.constant 0 : index
    %36 = vector.load %arg11[%c0_21, %c0_22] : memref<1x512xf32, #tpu.memory_space<vmem>>, vector<1x512xf32>
    tpu.vector_store %arg11[%c0_21, %c0_22], %35 {strides = array<i32>} : memref<1x512xf32, #tpu.memory_space<vmem>>, vector<1x512xf32>,
    return
  }
  func.func @transform_0(%arg0: i32) -> (i32, i32) {
    %c0_i32 = arith.constant 0 : i32
    %c0_i32_0 = arith.constant 0 : i32
    return %c0_i32, %arg0 : i32, i32
  }
  func.func @transform_1(%arg0: i32) -> (i32, i32) {
    %c0_i32 = arith.constant 0 : i32
    %c0_i32_0 = arith.constant 0 : i32
    %c0_i32_1 = arith.constant 0 : i32
    return %c0_i32, %c0_i32_0 : i32, i32
  }
  func.func @transform_2(%arg0: i32) -> (i32, i32) {
    %c0_i32 = arith.constant 0 : i32
    %c0_i32_0 = arith.constant 0 : i32
    %c0_i32_1 = arith.constant 0 : i32
    return %c0_i32, %c0_i32_0 : i32, i32
  }
  func.func @transform_3(%arg0: i32) -> (i32, i32) {
    %c0_i32 = arith.constant 0 : i32
    %c0_i32_0 = arith.constant 0 : i32
    %c0_i32_1 = arith.constant 0 : i32
    return %c0_i32, %c0_i32_0 : i32, i32
  }
  func.func @transform_4(%arg0: i32) -> (i32, i32) {
    %c0_i32 = arith.constant 0 : i32
    %c0_i32_0 = arith.constant 0 : i32
    %c0_i32_1 = arith.constant 0 : i32
    return %c0_i32, %c0_i32_0 : i32, i32
  }
  func.func @transform_5(%arg0: i32) -> (i32, i32) {
    %c0_i32 = arith.constant 0 : i32
    %c0_i32_0 = arith.constant 0 : i32
    %c0_i32_1 = arith.constant 0 : i32
    return %c0_i32, %c0_i32_0 : i32, i32
  }
  func.func @transform_6(%arg0: i32) -> (i32, i32) {
    %c0_i32 = arith.constant 0 : i32
    %c0_i32_0 = arith.constant 0 : i32
    %c0_i32_1 = arith.constant 0 : i32
    return %c0_i32, %c0_i32_0 : i32, i32
  }
  func.func @transform_7(%arg0: i32) -> (i32, i32) {
    %c0_i32 = arith.constant 0 : i32
    %c0_i32_0 = arith.constant 0 : i32
    %c0_i32_1 = arith.constant 0 : i32
    return %c0_i32, %c0_i32_0 : i32, i32
  }
  func.func @transform_8(%arg0: i32) -> (i32, i32) {
    %c0_i32 = arith.constant 0 : i32
    %c0_i32_0 = arith.constant 0 : i32
    %c0_i32_1 = arith.constant 0 : i32
    return %c0_i32, %c0_i32_0 : i32, i32
  }
  func.func @transform_9(%arg0: i32) -> (i32, i32) {
    %c0_i32 = arith.constant 0 : i32
    %c0_i32_0 = arith.constant 0 : i32
    %c0_i32_1 = arith.constant 0 : i32
    return %c0_i32, %c0_i32_0 : i32, i32
  }
  func.func @transform_10(%arg0: i32) -> (i32, i32) {
    %c0_i32 = arith.constant 0 : i32
    %c0_i32_0 = arith.constant 0 : i32
    return %c0_i32, %arg0 : i32, i32
  }
}

</mosaic_0001>

<llo_original>
// kernel: tpu_custom_call.1
$region0: #{tpu_custom_call.1}
  #allocation0 [shape = 'u32[]', space=smem, size = 0x4, offset = 0x4, fixed_abs, tag = 'smem constant byte address 0x4 - core index']
  #allocation1 [shape = 'u32[72,128]{1,0:T(1,128)}', space=vmem, size = 0x9000, scoped, tag = 'internal scratch']
  #allocation2 [shape = 'f32[1,1]{1,0:T(1,128)S(1)}', space=vmem, size = 0x200, scoped, tag = 'scoped memory for tpu_custom_call.1']
  %s0 = inlined_call_operand.vmem [shape: f32[2,2048], index: 0, kind: input, shape index: {}]
  %s1 = inlined_call_operand.vmem [shape: f32[32,1], index: 1, kind: input, shape index: {}]
  %s2 = inlined_call_operand.vmem [shape: f32[32,1], index: 2, kind: input, shape index: {}]
  %s3 = inlined_call_operand.vmem [shape: f32[32,1], index: 3, kind: input, shape index: {}]
  %s4 = inlined_call_operand.vmem [shape: f32[32,32], index: 4, kind: input, shape index: {}]
  %s5 = inlined_call_operand.vmem [shape: f32[32,1], index: 5, kind: input, shape index: {}]
  %s6 = inlined_call_operand.vmem [shape: f32[32,32], index: 6, kind: input, shape index: {}]
  %s7 = inlined_call_operand.vmem [shape: f32[32,1], index: 7, kind: input, shape index: {}]
  %s8 = inlined_call_operand.vmem [shape: f32[32,1], index: 8, kind: input, shape index: {}]
  %s9 = inlined_call_operand.<no memory space> [shape: f32[1,1], index: 9, kind: input, shape index: {}]
  %s10 = inlined_call_operand.hbm [shape: f32[1,2048], index: 10, kind: output, shape index: {}]
  %s11 = sld [smem:[#allocation0]]
  $region73: #{tpu_custom_call.1} parent=0
    _
  %s13 = ssub.s32 1, %s11
  %s14 = scalar_select 0, %s13, %s11
  %v15 = vstv %s9
  %16 = vst [vmem:[#allocation2] sm:$0x1] %v15
  $region1: #{tpu_custom_call.1} parent=0
    #allocation3 [shape = 'u8[4096]{0}', space=vmem, size = 0x1000, scoped, tag = 'output window, operand 0']
    #allocation4 [shape = 's32[2]{0}', space=sflag, size = 0x8, scoped, tag = 'scoped memory for tpu_custom_call.1']
    %17 = vsyncpa [#allocation4], 0
    %s18 = scalar_lea.sflag [#allocation4], 1
    %19 = vsyncpa %s18, 0
    loop: start=0, step=1, limit=6
    $region2: #{tpu_custom_call.1} parent=1 // loop_pre_header
      _
    $region3: #{tpu_custom_call.1} parent=1 // loop_header
      %s21 = sphi 0, %s25
      %p22 = scmp.ge.s32.totalorder %s21, 6
      %s31 = sphi 0, %s33
      %s34 = sphi 0, %s31
      %s35 = sphi 0, %s34
      %s51 = sphi 0, %s35
      %s55 = sphi 0, %s55
      %s57 = sphi 0, %s55
      %s58 = sphi 0, %s57
      %s72 = sphi 0, %s58
      %s76 = sphi 0, %s76
      %s78 = sphi 0, %s76
      %s79 = sphi 0, %s78
      %s93 = sphi 0, %s79
      %s97 = sphi 0, %s97
      %s99 = sphi 0, %s97
      %s100 = sphi 0, %s99
      %s114 = sphi 0, %s100
      %s118 = sphi 0, %s118
      %s120 = sphi 0, %s118
      %s121 = sphi 0, %s120
      %s135 = sphi 0, %s121
      %s139 = sphi 0, %s139
      %s141 = sphi 0, %s139
      %s142 = sphi 0, %s141
      %s156 = sphi 0, %s142
      %s160 = sphi 0, %s160
      %s162 = sphi 0, %s160
      %s163 = sphi 0, %s162
      %s177 = sphi 0, %s163
      %s181 = sphi 0, %s181
      %s183 = sphi 0, %s181
      %s184 = sphi 0, %s183
      %s198 = sphi 0, %s184
      %s202 = sphi 0, %s202
      %s204 = sphi 0, %s202
      %s205 = sphi 0, %s204
      %s219 = sphi 0, %s205
      %s223 = sphi 0, %s223
      %s225 = sphi 0, %s223
      %s226 = sphi 0, %s225
      %s240 = sphi 0, %s226
      %s246 = sphi 0, %s248
      %s249 = sphi 0, %s246
      %s250 = sphi 0, %s249
      %s266 = sphi 0, %s250
    $region4: #{tpu_custom_call.1} parent=1 // loop_header_branch
      %24 = sbr.rel (%p22) target = $region8
    $region5: #{tpu_custom_call.1} parent=1 // loop_body
      %s26 = ssub.s32 %s21, 1
      %s27 = ssub.s32 %s21, 2
      %s28 = sadd.s32 %s21, 1
      %s29 = ssub.s32 %s21, %s28
      %p30 = scmp.eq.s32.totalorder %s29, 0
      %s32 = sadd.s32 %s31, 1
      %s33 = scalar_select %p30, %s31, %s32
      %p36 = pneg %p30
      %p37 = scmp.eq.s32.totalorder %s21, 3
      %p38 = por %p36, %p37
      %p39 = scmp.ne.s32.totalorder %s31, %s34
      %p40 = scmp.eq.s32.totalorder %s21, 0
      %p41 = por %p39, %p40
      %p42 = scmp.ne.s32.totalorder %s31, %s34
      %p43 = scmp.eq.s32.totalorder %s26, 3
      %p44 = por %p42, %p43
      %p45 = scmp.ne.s32.totalorder %s34, %s35
      %p46 = scmp.eq.s32.totalorder %s26, 0
      %p47 = por %p45, %p46
      %p48 = scmp.ne.s32.totalorder %s34, %s35
      %p49 = scmp.eq.s32.totalorder %s27, 3
      %p50 = por %p48, %p49
      %p52 = scmp.ne.s32.totalorder %s35, %s51
      %p53 = scmp.eq.s32.totalorder %s27, 0
      %p54 = por %p52, %p53
      %s56 = sadd.s32 %s55, 1
      %p59 = scmp.eq.s32.totalorder %s21, 3
      %p60 = scmp.ne.s32.totalorder %s55, %s57
      %p61 = scmp.eq.s32.totalorder %s21, 0
      %p62 = por %p60, %p61
      %p63 = scmp.ne.s32.totalorder %s55, %s57
      %p64 = scmp.eq.s32.totalorder %s26, 3
      %p65 = por %p63, %p64
      %p66 = scmp.ne.s32.totalorder %s57, %s58
      %p67 = scmp.eq.s32.totalorder %s26, 0
      %p68 = por %p66, %p67
      %p69 = scmp.ne.s32.totalorder %s57, %s58
      %p70 = scmp.eq.s32.totalorder %s27, 3
      %p71 = por %p69, %p70
      %p73 = scmp.ne.s32.totalorder %s58, %s72
      %p74 = scmp.eq.s32.totalorder %s27, 0
      %p75 = por %p73, %p74
      %s77 = sadd.s32 %s76, 1
      %p80 = scmp.eq.s32.totalorder %s21, 3
      %p81 = scmp.ne.s32.totalorder %s76, %s78
      %p82 = scmp.eq.s32.totalorder %s21, 0
      %p83 = por %p81, %p82
      %p84 = scmp.ne.s32.totalorder %s76, %s78
      %p85 = scmp.eq.s32.totalorder %s26, 3
      %p86 = por %p84, %p85
      %p87 = scmp.ne.s32.totalorder %s78, %s79
      %p88 = scmp.eq.s32.totalorder %s26, 0
      %p89 = por %p87, %p88
      %p90 = scmp.ne.s32.totalorder %s78, %s79
      %p91 = scmp.eq.s32.totalorder %s27, 3
      %p92 = por %p90, %p91
      %p94 = scmp.ne.s32.totalorder %s79, %s93
      %p95 = scmp.eq.s32.totalorder %s27, 0
      %p96 = por %p94, %p95
      %s98 = sadd.s32 %s97, 1
      %p101 = scmp.eq.s32.totalorder %s21, 3
      %p102 = scmp.ne.s32.totalorder %s97, %s99
      %p103 = scmp.eq.s32.totalorder %s21, 0
      %p104 = por %p102, %p103
      %p105 = scmp.ne.s32.totalorder %s97, %s99
      %p106 = scmp.eq.s32.totalorder %s26, 3
      %p107 = por %p105, %p106
      %p108 = scmp.ne.s32.totalorder %s99, %s100
      %p109 = scmp.eq.s32.totalorder %s26, 0
      %p110 = por %p108, %p109
      %p111 = scmp.ne.s32.totalorder %s99, %s100
      %p112 = scmp.eq.s32.totalorder %s27, 3
      %p113 = por %p111, %p112
      %p115 = scmp.ne.s32.totalorder %s100, %s114
      %p116 = scmp.eq.s32.totalorder %s27, 0
      %p117 = por %p115, %p116
      %s119 = sadd.s32 %s118, 1
      %p122 = scmp.eq.s32.totalorder %s21, 3
      %p123 = scmp.ne.s32.totalorder %s118, %s120
      %p124 = scmp.eq.s32.totalorder %s21, 0
      %p125 = por %p123, %p124
      %p126 = scmp.ne.s32.totalorder %s118, %s120
      %p127 = scmp.eq.s32.totalorder %s26, 3
      %p128 = por %p126, %p127
      %p129 = scmp.ne.s32.totalorder %s120, %s121
      %p130 = scmp.eq.s32.totalorder %s26, 0
      %p131 = por %p129, %p130
      %p132 = scmp.ne.s32.totalorder %s120, %s121
      %p133 = scmp.eq.s32.totalorder %s27, 3
      %p134 = por %p132, %p133
      %p136 = scmp.ne.s32.totalorder %s121, %s135
      %p137 = scmp.eq.s32.totalorder %s27, 0
      %p138 = por %p136, %p137
      %s140 = sadd.s32 %s139, 1
      %p143 = scmp.eq.s32.totalorder %s21, 3
      %p144 = scmp.ne.s32.totalorder %s139, %s141
      %p145 = scmp.eq.s32.totalorder %s21, 0
      %p146 = por %p144, %p145
      %p147 = scmp.ne.s32.totalorder %s139, %s141
      %p148 = scmp.eq.s32.totalorder %s26, 3
      %p149 = por %p147, %p148
      %p150 = scmp.ne.s32.totalorder %s141, %s142
      %p151 = scmp.eq.s32.totalorder %s26, 0
      %p152 = por %p150, %p151
      %p153 = scmp.ne.s32.totalorder %s141, %s142
      %p154 = scmp.eq.s32.totalorder %s27, 3
      %p155 = por %p153, %p154
      %p157 = scmp.ne.s32.totalorder %s142, %s156
      %p158 = scmp.eq.s32.totalorder %s27, 0
      %p159 = por %p157, %p158
      %s161 = sadd.s32 %s160, 1
      %p164 = scmp.eq.s32.totalorder %s21, 3
      %p165 = scmp.ne.s32.totalorder %s160, %s162
      %p166 = scmp.eq.s32.totalorder %s21, 0
      %p167 = por %p165, %p166
      %p168 = scmp.ne.s32.totalorder %s160, %s162
      %p169 = scmp.eq.s32.totalorder %s26, 3
      %p170 = por %p168, %p169
      %p171 = scmp.ne.s32.totalorder %s162, %s163
      %p172 = scmp.eq.s32.totalorder %s26, 0
      %p173 = por %p171, %p172
      %p174 = scmp.ne.s32.totalorder %s162, %s163
      %p175 = scmp.eq.s32.totalorder %s27, 3
      %p176 = por %p174, %p175
      %p178 = scmp.ne.s32.totalorder %s163, %s177
      %p179 = scmp.eq.s32.totalorder %s27, 0
      %p180 = por %p178, %p179
      %s182 = sadd.s32 %s181, 1
      %p185 = scmp.eq.s32.totalorder %s21, 3
      %p186 = scmp.ne.s32.totalorder %s181, %s183
      %p187 = scmp.eq.s32.totalorder %s21, 0
      %p188 = por %p186, %p187
      %p189 = scmp.ne.s32.totalorder %s181, %s183
      %p190 = scmp.eq.s32.totalorder %s26, 3
      %p191 = por %p189, %p190
      %p192 = scmp.ne.s32.totalorder %s183, %s184
      %p193 = scmp.eq.s32.totalorder %s26, 0
      %p194 = por %p192, %p193
      %p195 = scmp.ne.s32.totalorder %s183, %s184
      %p196 = scmp.eq.s32.totalorder %s27, 3
      %p197 = por %p195, %p196
      %p199 = scmp.ne.s32.totalorder %s184, %s198
      %p200 = scmp.eq.s32.totalorder %s27, 0
      %p201 = por %p199, %p200
      %s203 = sadd.s32 %s202, 1
      %p206 = scmp.eq.s32.totalorder %s21, 3
      %p207 = scmp.ne.s32.totalorder %s202, %s204
      %p208 = scmp.eq.s32.totalorder %s21, 0
      %p209 = por %p207, %p208
      %p210 = scmp.ne.s32.totalorder %s202, %s204
      %p211 = scmp.eq.s32.totalorder %s26, 3
      %p212 = por %p210, %p211
      %p213 = scmp.ne.s32.totalorder %s204, %s205
      %p214 = scmp.eq.s32.totalorder %s26, 0
      %p215 = por %p213, %p214
      %p216 = scmp.ne.s32.totalorder %s204, %s205
      %p217 = scmp.eq.s32.totalorder %s27, 3
      %p218 = por %p216, %p217
      %p220 = scmp.ne.s32.totalorder %s205, %s219
      %p221 = scmp.eq.s32.totalorder %s27, 0
      %p222 = por %p220, %p221
      %s224 = sadd.s32 %s223, 1
      %p227 = scmp.eq.s32.totalorder %s21, 3
      %p228 = scmp.ne.s32.totalorder %s223, %s225
      %p229 = scmp.eq.s32.totalorder %s21, 0
      %p230 = por %p228, %p229
      %p231 = scmp.ne.s32.totalorder %s223, %s225
      %p232 = scmp.eq.s32.totalorder %s26, 3
      %p233 = por %p231, %p232
      %p234 = scmp.ne.s32.totalorder %s225, %s226
      %p235 = scmp.eq.s32.totalorder %s26, 0
      %p236 = por %p234, %p235
      %p237 = scmp.ne.s32.totalorder %s225, %s226
      %p238 = scmp.eq.s32.totalorder %s27, 3
      %p239 = por %p237, %p238
      %p241 = scmp.ne.s32.totalorder %s226, %s240
      %p242 = scmp.eq.s32.totalorder %s27, 0
      %p243 = por %p241, %p242
      %s244 = ssub.s32 %s21, %s28
      %p245 = scmp.eq.s32.totalorder %s244, 0
      %s247 = sadd.s32 %s246, 1
      %s248 = scalar_select %p245, %s246, %s247
      %p251 = pneg %p245
      %p252 = scmp.eq.s32.totalorder %s21, 3
      %p253 = por %p251, %p252
      %p254 = scmp.ne.s32.totalorder %s246, %s249
      %p255 = scmp.eq.s32.totalorder %s21, 0
      %p256 = por %p254, %p255
      %p257 = scmp.ne.s32.totalorder %s246, %s249
      %p258 = scmp.eq.s32.totalorder %s26, 3
      %p259 = por %p257, %p258
      %p260 = scmp.ne.s32.totalorder %s249, %s250
      %p261 = scmp.eq.s32.totalorder %s26, 0
      %p262 = por %p260, %p261
      %p263 = scmp.ne.s32.totalorder %s249, %s250
      %p264 = scmp.eq.s32.totalorder %s27, 3
      %p265 = por %p263, %p264
      %p267 = scmp.ne.s32.totalorder %s250, %s266
      %p268 = scmp.eq.s32.totalorder %s27, 0
      %p269 = por %p267, %p268
      %p270 = scmp.le.s32.totalorder 1, %s21
      %p271 = scmp.lt.s32.totalorder %s21, 5
      %p272 = pnand %p270, %p271
      %p273 = pneg %p272
      // Predicated region
      $region9: #{tpu_custom_call.1} parent=5 // pred_check
        _
      $region10: #{tpu_custom_call.1} parent=5 // pred_check_branch
        %275 = sbr.rel (%p272) target = $region12
      $region11: #{tpu_custom_call.1} parent=5 // pred_region
        %s276 = ssub.s32 %s21, 1
        // Predicated region
        $region13: #{tpu_custom_call.1} parent=11 // pred_check
          %p277 = pneg %p68
        $region14: #{tpu_custom_call.1} parent=11 // pred_check_branch
          %279 = sbr.rel (%p277) target = $region16
        $region15: #{tpu_custom_call.1} parent=11 // pred_region
          _
        $region16: #{tpu_custom_call.1} parent=11 // pred_fallthru
          _
        // Predicated region
        $region17: #{tpu_custom_call.1} parent=11 // pred_check
          %p280 = pneg %p89
        $region18: #{tpu_custom_call.1} parent=11 // pred_check_branch
          %282 = sbr.rel (%p280) target = $region20
        $region19: #{tpu_custom_call.1} parent=11 // pred_region
          _
        $region20: #{tpu_custom_call.1} parent=11 // pred_fallthru
          _
        // Predicated region
        $region21: #{tpu_custom_call.1} parent=11 // pred_check
          %p283 = pneg %p110
        $region22: #{tpu_custom_call.1} parent=11 // pred_check_branch
          %285 = sbr.rel (%p283) target = $region24
        $region23: #{tpu_custom_call.1} parent=11 // pred_region
          _
        $region24: #{tpu_custom_call.1} parent=11 // pred_fallthru
          _
        // Predicated region
        $region25: #{tpu_custom_call.1} parent=11 // pred_check
          %p286 = pneg %p131
        $region26: #{tpu_custom_call.1} parent=11 // pred_check_branch
          %288 = sbr.rel (%p286) target = $region28
        $region27: #{tpu_custom_call.1} parent=11 // pred_region
          _
        $region28: #{tpu_custom_call.1} parent=11 // pred_fallthru
          _
        // Predicated region
        $region29: #{tpu_custom_call.1} parent=11 // pred_check
          %p289 = pneg %p152
        $region30: #{tpu_custom_call.1} parent=11 // pred_check_branch
          %291 = sbr.rel (%p289) target = $region32
        $region31: #{tpu_custom_call.1} parent=11 // pred_region
          _
        $region32: #{tpu_custom_call.1} parent=11 // pred_fallthru
          _
        // Predicated region
        $region33: #{tpu_custom_call.1} parent=11 // pred_check
          %p292 = pneg %p173
        $region34: #{tpu_custom_call.1} parent=11 // pred_check_branch
          %294 = sbr.rel (%p292) target = $region36
        $region35: #{tpu_custom_call.1} parent=11 // pred_region
          _
        $region36: #{tpu_custom_call.1} parent=11 // pred_fallthru
          _
        // Predicated region
        $region37: #{tpu_custom_call.1} parent=11 // pred_check
          %p295 = pneg %p194
        $region38: #{tpu_custom_call.1} parent=11 // pred_check_branch
          %297 = sbr.rel (%p295) target = $region40
        $region39: #{tpu_custom_call.1} parent=11 // pred_region
          _
        $region40: #{tpu_custom_call.1} parent=11 // pred_fallthru
          _
        // Predicated region
        $region41: #{tpu_custom_call.1} parent=11 // pred_check
          %p298 = pneg %p215
        $region42: #{tpu_custom_call.1} parent=11 // pred_check_branch
          %300 = sbr.rel (%p298) target = $region44
        $region43: #{tpu_custom_call.1} parent=11 // pred_region
          _
        $region44: #{tpu_custom_call.1} parent=11 // pred_fallthru
          _
        // Predicated region
        $region45: #{tpu_custom_call.1} parent=11 // pred_check
          %p301 = pneg %p236
        $region46: #{tpu_custom_call.1} parent=11 // pred_check_branch
          %303 = sbr.rel (%p301) target = $region48
        $region47: #{tpu_custom_call.1} parent=11 // pred_region
          _
        $region48: #{tpu_custom_call.1} parent=11 // pred_fallthru
          _
      $region12: #{tpu_custom_call.1} parent=5 // pred_fallthru
        _
      %p304 = scmp.lt.s32.totalorder %s21, 4
      // Predicated region
      $region49: #{tpu_custom_call.1} parent=5 // pred_check
        %p305 = pneg %p304
      $region50: #{tpu_custom_call.1} parent=5 // pred_check_branch
        %307 = sbr.rel (%p305) target = $region52
      $region51: #{tpu_custom_call.1} parent=5 // pred_region
        // Predicated region
        $region53: #{tpu_custom_call.1} parent=51 // pred_check
          %p308 = pneg %p41
        $region54: #{tpu_custom_call.1} parent=51 // pred_check_branch
          %310 = sbr.rel (%p308) target = $region56
        $region55: #{tpu_custom_call.1} parent=51 // pred_region
          %s311 = smul.u32 4, %s21
          %p312 = scmp.lt.s32.totalorder %s311, 15
          %s313 = scalar_select %p312, %s311, 15
          %s314 = smul.addr %s313, 2
          %s315 = scalar_lea.vmem %s0, %s314
          %s316 = smul.u32 4, %s21
        $region56: #{tpu_custom_call.1} parent=51 // pred_fallthru
          _
      $region52: #{tpu_custom_call.1} parent=5 // pred_fallthru
        _
      %p317 = scmp.le.s32.totalorder 1, %s21
      %p318 = scmp.lt.s32.totalorder %s21, 5
      %p319 = pnand %p317, %p318
      %p320 = pneg %p319
      // Predicated region
      $region57: #{tpu_custom_call.1} parent=5 // pred_check
        _
      $region58: #{tpu_custom_call.1} parent=5 // pred_check_branch
        %322 = sbr.rel (%p319) target = $region60
      $region59: #{tpu_custom_call.1} parent=5 // pred_region
        %s323 = ssub.s32 %s21, 1
        %s324 = smul.u32 4, %s26
        %p325 = scmp.lt.s32.totalorder %s324, 15
        %s326 = scalar_select %p325, %s324, 15
        %s327 = smul.addr %s326, 2
        %s328 = scalar_lea.vmem %s0, %s327
        %p329 = pneg %p47
        %p330 = pneg %p44
        %p331 = pneg %p68
        %p332 = pneg %p65
        %p333 = pneg %p89
        %p334 = pneg %p86
        %p335 = pneg %p110
        %p336 = pneg %p107
        %p337 = pneg %p131
        %p338 = pneg %p128
        %p339 = pneg %p152
        %p340 = pneg %p149
        %p341 = pneg %p173
        %p342 = pneg %p170
        %p343 = pneg %p194
        %p344 = pneg %p191
        %p345 = pneg %p215
        %p346 = pneg %p212
        %p347 = pneg %p236
        %p348 = pneg %p233
        %p349 = pneg %p262
        %p350 = pneg %p259
        %s351 = sand.u32 %s249, 1
        %s352 = scalar_lea.sflag [#allocation4], %s351
        %s353 = sand.u32 %s249, 1
        %s354 = smul.addr %s353, 4
        %s355 = scalar_lea.vmem [#allocation3], %s354
        %s356 = smul.u32 4, %s26
        %p357 = scmp.lt.s32.totalorder %s356, 15
        %s358 = scalar_select %p357, %s356, 15
        %s359 = smul.addr %s358, 2
        %s360 = scalar_lea.vmem %s0, %s359
        %s361 = smul.u32 4, %s26
        %s362 = smul.u32 4, %s26
        %v363 = vld [vmem:[%s360] sm:$0xff]
        %v364 = vld [vmem:[%s1] sm:$0xff]
        %v365 = vld [vmem:[%s1 + $0x8] sm:$0xff]
        %v366 = vld [vmem:[%s1 + $0x10] sm:$0xff]
        %v367 = vld [vmem:[%s1 + $0x18] sm:$0xff]
        %v368 = vld [vmem:[%s2] sm:$0xff]
        %v369 = vld [vmem:[%s2 + $0x8] sm:$0xff]
        %v370 = vld [vmem:[%s2 + $0x10] sm:$0xff]
        %v371 = vld [vmem:[%s2 + $0x18] sm:$0xff]
        %v372 = vld [vmem:[%s3] sm:$0xff]
        %v373 = vld [vmem:[%s3 + $0x8] sm:$0xff]
        %v374 = vld [vmem:[%s3 + $0x10] sm:$0xff]
        %v375 = vld [vmem:[%s3 + $0x18] sm:$0xff]
        %v376 = vld [vmem:[%s5] sm:$0xff]
        %v377 = vld [vmem:[%s5 + $0x8] sm:$0xff]
        %v378 = vld [vmem:[%s5 + $0x10] sm:$0xff]
        %v379 = vld [vmem:[%s5 + $0x18] sm:$0xff]
        %v380 = vld [vmem:[%s7] sm:$0xff]
        %v381 = vld [vmem:[%s7 + $0x8] sm:$0xff]
        %v382 = vld [vmem:[%s7 + $0x10] sm:$0xff]
        %v383 = vld [vmem:[%s7 + $0x18] sm:$0xff]
        %v384 = vld [vmem:[%s8] sm:$0xff]
        %v385 = vld [vmem:[%s8 + $0x8] sm:$0xff]
        %v386 = vld [vmem:[%s8 + $0x10] sm:$0xff]
        %v387 = vld [vmem:[%s8 + $0x18] sm:$0xff]
        %v388 = vld [vmem:[#allocation2] sm:$0x1]
        %390 = vset.pattern.permute.xlu0 0
        %391 = vperm.xlu0 %390, %v364
        %v392 = vpop.permute.xlu0 %391
        %395 = vset.pattern.permute.xlu0 0
        %396 = vperm.xlu0 %395, %v365
        %v397 = vpop.permute.xlu0 %396
        %400 = vset.pattern.permute.xlu0 0
        %401 = vperm.xlu0 %400, %v366
        %v402 = vpop.permute.xlu0 %401
        %405 = vset.pattern.permute.xlu0 0
        %406 = vperm.xlu0 %405, %v367
        %v407 = vpop.permute.xlu0 %406
        %v410 = vperm.slane %v363, 0
        %v411 = vperm.slane %v363, 2
        %v412 = vperm.slane %v363, 4
        %v413 = vperm.slane %v363, 6
        %v418 = vperm.slane %v410, 0
        %v419 = vperm.slane %v411, 0
        %v420 = vperm.slane %v412, 0
        %v421 = vperm.slane %v413, 0
        %v422 = vmul.f32 %v392, %v418
        %v423 = vmul.f32 %v392, %v419
        %v424 = vmul.f32 %v392, %v420
        %v425 = vmul.f32 %v392, %v421
        %v426 = vmul.f32 %v397, %v418
        %v427 = vmul.f32 %v397, %v419
        %v428 = vmul.f32 %v397, %v420
        %v429 = vmul.f32 %v397, %v421
        %v430 = vmul.f32 %v402, %v418
        %v431 = vmul.f32 %v402, %v419
        %v432 = vmul.f32 %v402, %v420
        %v433 = vmul.f32 %v402, %v421
        %v434 = vmul.f32 %v407, %v418
        %v435 = vmul.f32 %v407, %v419
        %v436 = vmul.f32 %v407, %v420
        %v437 = vmul.f32 %v407, %v421
        %439 = vset.pattern.permute.xlu0 0
        %440 = vperm.xlu0 %439, %v368
        %v441 = vpop.permute.xlu0 %440
        %444 = vset.pattern.permute.xlu0 0
        %445 = vperm.xlu0 %444, %v369
        %v446 = vpop.permute.xlu0 %445
        %449 = vset.pattern.permute.xlu0 0
        %450 = vperm.xlu0 %449, %v370
        %v451 = vpop.permute.xlu0 %450
        %454 = vset.pattern.permute.xlu0 0
        %455 = vperm.xlu0 %454, %v371
        %v456 = vpop.permute.xlu0 %455
        %v458 = vperm.slane %v363, 1
        %v459 = vperm.slane %v363, 3
        %v460 = vperm.slane %v363, 5
        %v461 = vperm.slane %v363, 7
        %v466 = vperm.slane %v458, 1
        %v467 = vperm.slane %v459, 1
        %v468 = vperm.slane %v460, 1
        %v469 = vperm.slane %v461, 1
        %v470 = vmul.f32 %v441, %v466
        %v471 = vmul.f32 %v441, %v467
        %v472 = vmul.f32 %v441, %v468
        %v473 = vmul.f32 %v441, %v469
        %v474 = vmul.f32 %v446, %v466
        %v475 = vmul.f32 %v446, %v467
        %v476 = vmul.f32 %v446, %v468
        %v477 = vmul.f32 %v446, %v469
        %v478 = vmul.f32 %v451, %v466
        %v479 = vmul.f32 %v451, %v467
        %v480 = vmul.f32 %v451, %v468
        %v481 = vmul.f32 %v451, %v469
        %v482 = vmul.f32 %v456, %v466
        %v483 = vmul.f32 %v456, %v467
        %v484 = vmul.f32 %v456, %v468
        %v485 = vmul.f32 %v456, %v469
        %v486 = vadd.f32 %v422, %v470
        %v487 = vadd.f32 %v423, %v471
        %v488 = vadd.f32 %v424, %v472
        %v489 = vadd.f32 %v425, %v473
        %v490 = vadd.f32 %v426, %v474
        %v491 = vadd.f32 %v427, %v475
        %v492 = vadd.f32 %v428, %v476
        %v493 = vadd.f32 %v429, %v477
        %v494 = vadd.f32 %v430, %v478
        %v495 = vadd.f32 %v431, %v479
        %v496 = vadd.f32 %v432, %v480
        %v497 = vadd.f32 %v433, %v481
        %v498 = vadd.f32 %v434, %v482
        %v499 = vadd.f32 %v435, %v483
        %v500 = vadd.f32 %v436, %v484
        %v501 = vadd.f32 %v437, %v485
        %503 = vset.pattern.permute.xlu0 0
        %504 = vperm.xlu0 %503, %v372
        %v505 = vpop.permute.xlu0 %504
        %508 = vset.pattern.permute.xlu0 0
        %509 = vperm.xlu0 %508, %v373
        %v510 = vpop.permute.xlu0 %509
        %513 = vset.pattern.permute.xlu0 0
        %514 = vperm.xlu0 %513, %v374
        %v515 = vpop.permute.xlu0 %514
        %518 = vset.pattern.permute.xlu0 0
        %519 = vperm.xlu0 %518, %v375
        %v520 = vpop.permute.xlu0 %519
        %v522 = vadd.f32 %v486, %v505
        %v523 = vadd.f32 %v487, %v505
        %v524 = vadd.f32 %v488, %v505
        %v525 = vadd.f32 %v489, %v505
        %v526 = vadd.f32 %v490, %v510
        %v527 = vadd.f32 %v491, %v510
        %v528 = vadd.f32 %v492, %v510
        %v529 = vadd.f32 %v493, %v510
        %v530 = vadd.f32 %v494, %v515
        %v531 = vadd.f32 %v495, %v515
        %v532 = vadd.f32 %v496, %v515
        %v533 = vadd.f32 %v497, %v515
        %v534 = vadd.f32 %v498, %v520
        %v535 = vadd.f32 %v499, %v520
        %v536 = vadd.f32 %v500, %v520
        %v537 = vadd.f32 %v501, %v520
        %v538 = vtanh.pop %v522
        %v539 = vtanh.pop %v523
        %v540 = vtanh.pop %v524
        %v541 = vtanh.pop %v525
        %v542 = vtanh.pop %v526
        %v543 = vtanh.pop %v527
        %v544 = vtanh.pop %v528
        %v545 = vtanh.pop %v529
        %v546 = vtanh.pop %v530
        %v547 = vtanh.pop %v531
        %v548 = vtanh.pop %v532
        %v549 = vtanh.pop %v533
        %v550 = vtanh.pop %v534
        %v551 = vtanh.pop %v535
        %v552 = vtanh.pop %v536
        %v553 = vtanh.pop %v537
        %v554 = vld [vmem:[%s4] sm:$0xff]
        %v555 = vld [vmem:[%s4 + $0x8] sm:$0xff]
        %v556 = vld [vmem:[%s4 + $0x10] sm:$0xff]
        %v557 = vld [vmem:[%s4 + $0x18] sm:$0xff]
        %559 = vset.pattern.permute.xlu0 0
        %560 = vperm.xlu0 %559, %v376
        %v561 = vpop.permute.xlu0 %560
        %564 = vset.pattern.permute.xlu0 0
        %565 = vperm.xlu0 %564, %v377
        %v566 = vpop.permute.xlu0 %565
        %569 = vset.pattern.permute.xlu0 0
        %570 = vperm.xlu0 %569, %v378
        %v571 = vpop.permute.xlu0 %570
        %574 = vset.pattern.permute.xlu0 0
        %575 = vperm.xlu0 %574, %v379
        %v576 = vpop.permute.xlu0 %575
        %vm578 = vcmask 261120
        %v580 = vsel %vm578, %v554, 0
        %v583 = vsel %vm578, %v555, 0
        %v586 = vsel %vm578, %v556, 0
        %v589 = vsel %vm578, %v557, 0
        %591 = vmatpush.msra.mxu0 0.0
        %592 = vmatpush.msra.mxu0 0.0
        %593 = vmatpush.msra.mxu0 0.0
        %594 = vmatpush.msra.mxu0 0.0
        %595 = vmatpush.msra.mxu0 0.0
        %596 = vmatpush.msra.mxu0 0.0
        %597 = vmatpush.msra.mxu0 0.0
        %598 = vmatpush.msra.mxu0 0.0
        %599 = vmatpush.msra.mxu0 0.0
        %600 = vmatpush.msra.mxu0 0.0
        %601 = vmatpush.msra.mxu0 0.0
        %602 = vmatpush.msra.mxu0 0.0
        %v603 = vand.u32 %v550, 4294901760
        %604 = vmatpush.msra.mxu0 %v603
        %v605 = vand.u32 %v546, 4294901760
        %606 = vmatpush.msra.mxu0 %v605
        %v607 = vand.u32 %v542, 4294901760
        %608 = vmatpush.msra.mxu0 %v607
        %v609 = vand.u32 %v538, 4294901760
        %610 = vmatpush.msra.mxu0 %v609
        %v611 = vand.u32 %v580, 4294901760
        %v612 = vsub.f32 %v580, %v611
        %v613 = vand.u32 %v612, 4294901760
        %v614 = vsub.f32 %v612, %v613
        %v615 = vand.u32 %v614, 4294901760
        %616 = vmatmul.f32.gmra.mxu0 %v615
        %v617 = vpop.f32.mrf.mxu0
        %v618 = vadd.f32 %v561, %v617
        %v619 = vand.u32 %v583, 4294901760
        %v620 = vsub.f32 %v583, %v619
        %v621 = vand.u32 %v620, 4294901760
        %v622 = vsub.f32 %v620, %v621
        %v623 = vand.u32 %v622, 4294901760
        %624 = vmatmul.f32.gmra.mxu0 %v623
        %v625 = vpop.f32.mrf.mxu0
        %v626 = vadd.f32 %v566, %v625
        %v627 = vand.u32 %v586, 4294901760
        %v628 = vsub.f32 %v586, %v627
        %v629 = vand.u32 %v628, 4294901760
        %v630 = vsub.f32 %v628, %v629
        %v631 = vand.u32 %v630, 4294901760
        %632 = vmatmul.f32.gmra.mxu0 %v631
        %v633 = vpop.f32.mrf.mxu0
        %v634 = vadd.f32 %v571, %v633
        %v635 = vand.u32 %v589, 4294901760
        %v636 = vsub.f32 %v589, %v635
        %v637 = vand.u32 %v636, 4294901760
        %v638 = vsub.f32 %v636, %v637
        %v639 = vand.u32 %v638, 4294901760
        %640 = vmatmul.f32.gmra.mxu0 %v639
        %v641 = vpop.f32.mrf.mxu0
        %v642 = vadd.f32 %v576, %v641
        %643 = vdwg.mxu0
        %644 = vmatpush.msra.mxu0 0.0
        %645 = vmatpush.msra.mxu0 0.0
        %646 = vmatpush.msra.mxu0 0.0
        %647 = vmatpush.msra.mxu0 0.0
        %648 = vmatpush.msra.mxu0 0.0
        %649 = vmatpush.msra.mxu0 0.0
        %650 = vmatpush.msra.mxu0 0.0
        %651 = vmatpush.msra.mxu0 0.0
        %652 = vmatpush.msra.mxu0 0.0
        %653 = vmatpush.msra.mxu0 0.0
        %654 = vmatpush.msra.mxu0 0.0
        %655 = vmatpush.msra.mxu0 0.0
        %v656 = vand.u32 %v550, 4294901760
        %v657 = vsub.f32 %v550, %v656
        %v658 = vand.u32 %v657, 4294901760
        %v659 = vsub.f32 %v657, %v658
        %v660 = vand.u32 %v659, 4294901760
        %661 = vmatpush.msra.mxu0 %v660
        %v662 = vand.u32 %v546, 4294901760
        %v663 = vsub.f32 %v546, %v662
        %v664 = vand.u32 %v663, 4294901760
        %v665 = vsub.f32 %v663, %v664
        %v666 = vand.u32 %v665, 4294901760
        %667 = vmatpush.msra.mxu0 %v666
        %v668 = vand.u32 %v542, 4294901760
        %v669 = vsub.f32 %v542, %v668
        %v670 = vand.u32 %v669, 4294901760
        %v671 = vsub.f32 %v669, %v670
        %v672 = vand.u32 %v671, 4294901760
        %673 = vmatpush.msra.mxu0 %v672
        %v674 = vand.u32 %v538, 4294901760
        %v675 = vsub.f32 %v538, %v674
        %v676 = vand.u32 %v675, 4294901760
        %v677 = vsub.f32 %v675, %v676
        %v678 = vand.u32 %v677, 4294901760
        %679 = vmatpush.msra.mxu0 %v678
        %v680 = vand.u32 %v580, 4294901760
        %681 = vmatmul.f32.gmra.mxu0 %v680
        %v682 = vpop.f32.mrf.mxu0
        %v683 = vadd.f32 %v618, %v682
        %v684 = vand.u32 %v583, 4294901760
        %685 = vmatmul.f32.gmra.mxu0 %v684
        %v686 = vpop.f32.mrf.mxu0
        %v687 = vadd.f32 %v626, %v686
        %v688 = vand.u32 %v586, 4294901760
        %689 = vmatmul.f32.gmra.mxu0 %v688
        %v690 = vpop.f32.mrf.mxu0
        %v691 = vadd.f32 %v634, %v690
        %v692 = vand.u32 %v589, 4294901760
        %693 = vmatmul.f32.gmra.mxu0 %v692
        %v694 = vpop.f32.mrf.mxu0
        %v695 = vadd.f32 %v642, %v694
        %696 = vdwg.mxu0
        %697 = vmatpush.msra.mxu0 0.0
        %698 = vmatpush.msra.mxu0 0.0
        %699 = vmatpush.msra.mxu0 0.0
        %700 = vmatpush.msra.mxu0 0.0
        %701 = vmatpush.msra.mxu0 0.0
        %702 = vmatpush.msra.mxu0 0.0
        %703 = vmatpush.msra.mxu0 0.0
        %704 = vmatpush.msra.mxu0 0.0
        %705 = vmatpush.msra.mxu0 0.0
        %706 = vmatpush.msra.mxu0 0.0
        %707 = vmatpush.msra.mxu0 0.0
        %708 = vmatpush.msra.mxu0 0.0
        %v709 = vand.u32 %v550, 4294901760
        %v710 = vsub.f32 %v550, %v709
        %711 = vmatpush.msra.mxu0 %v710
        %v712 = vand.u32 %v546, 4294901760
        %v713 = vsub.f32 %v546, %v712
        %714 = vmatpush.msra.mxu0 %v713
        %v715 = vand.u32 %v542, 4294901760
        %v716 = vsub.f32 %v542, %v715
        %717 = vmatpush.msra.mxu0 %v716
        %v718 = vand.u32 %v538, 4294901760
        %v719 = vsub.f32 %v538, %v718
        %720 = vmatpush.msra.mxu0 %v719
        %v721 = vand.u32 %v580, 4294901760
        %v722 = vsub.f32 %v580, %v721
        %723 = vmatmul.f32.gmra.mxu0 %v722
        %v724 = vpop.f32.mrf.mxu0
        %v725 = vadd.f32 %v683, %v724
        %v726 = vand.u32 %v583, 4294901760
        %v727 = vsub.f32 %v583, %v726
        %728 = vmatmul.f32.gmra.mxu0 %v727
        %v729 = vpop.f32.mrf.mxu0
        %v730 = vadd.f32 %v687, %v729
        %v731 = vand.u32 %v586, 4294901760
        %v732 = vsub.f32 %v586, %v731
        %733 = vmatmul.f32.gmra.mxu0 %v732
        %v734 = vpop.f32.mrf.mxu0
        %v735 = vadd.f32 %v691, %v734
        %v736 = vand.u32 %v589, 4294901760
        %v737 = vsub.f32 %v589, %v736
        %738 = vmatmul.f32.gmra.mxu0 %v737
        %v739 = vpop.f32.mrf.mxu0
        %v740 = vadd.f32 %v695, %v739
        %741 = vdwg.mxu0
        %742 = vmatpush.msra.mxu0 0.0
        %743 = vmatpush.msra.mxu0 0.0
        %744 = vmatpush.msra.mxu0 0.0
        %745 = vmatpush.msra.mxu0 0.0
        %746 = vmatpush.msra.mxu0 0.0
        %747 = vmatpush.msra.mxu0 0.0
        %748 = vmatpush.msra.mxu0 0.0
        %749 = vmatpush.msra.mxu0 0.0
        %750 = vmatpush.msra.mxu0 0.0
        %751 = vmatpush.msra.mxu0 0.0
        %752 = vmatpush.msra.mxu0 0.0
        %753 = vmatpush.msra.mxu0 0.0
        %v754 = vand.u32 %v550, 4294901760
        %755 = vmatpush.msra.mxu0 %v754
        %v756 = vand.u32 %v546, 4294901760
        %757 = vmatpush.msra.mxu0 %v756
        %v758 = vand.u32 %v542, 4294901760
        %759 = vmatpush.msra.mxu0 %v758
        %v760 = vand.u32 %v538, 4294901760
        %761 = vmatpush.msra.mxu0 %v760
        %v762 = vand.u32 %v580, 4294901760
        %v763 = vsub.f32 %v580, %v762
        %v764 = vand.u32 %v763, 4294901760
        %765 = vmatmul.f32.gmra.mxu0 %v764
        %v766 = vpop.f32.mrf.mxu0
        %v767 = vadd.f32 %v725, %v766
        %v768 = vand.u32 %v583, 4294901760
        %v769 = vsub.f32 %v583, %v768
        %v770 = vand.u32 %v769, 4294901760
        %771 = vmatmul.f32.gmra.mxu0 %v770
        %v772 = vpop.f32.mrf.mxu0
        %v773 = vadd.f32 %v730, %v772
        %v774 = vand.u32 %v586, 4294901760
        %v775 = vsub.f32 %v586, %v774
        %v776 = vand.u32 %v775, 4294901760
        %777 = vmatmul.f32.gmra.mxu0 %v776
        %v778 = vpop.f32.mrf.mxu0
        %v779 = vadd.f32 %v735, %v778
        %v780 = vand.u32 %v589, 4294901760
        %v781 = vsub.f32 %v589, %v780
        %v782 = vand.u32 %v781, 4294901760
        %783 = vmatmul.f32.gmra.mxu0 %v782
        %v784 = vpop.f32.mrf.mxu0
        %v785 = vadd.f32 %v740, %v784
        %786 = vdwg.mxu0
        %787 = vmatpush.msra.mxu0 0.0
        %788 = vmatpush.msra.mxu0 0.0
        %789 = vmatpush.msra.mxu0 0.0
        %790 = vmatpush.msra.mxu0 0.0
        %791 = vmatpush.msra.mxu0 0.0
        %792 = vmatpush.msra.mxu0 0.0
        %793 = vmatpush.msra.mxu0 0.0
        %794 = vmatpush.msra.mxu0 0.0
        %795 = vmatpush.msra.mxu0 0.0
        %796 = vmatpush.msra.mxu0 0.0
        %797 = vmatpush.msra.mxu0 0.0
        %798 = vmatpush.msra.mxu0 0.0
        %v799 = vand.u32 %v550, 4294901760
        %v800 = vsub.f32 %v550, %v799
        %v801 = vand.u32 %v800, 4294901760
        %802 = vmatpush.msra.mxu0 %v801
        %v803 = vand.u32 %v546, 4294901760
        %v804 = vsub.f32 %v546, %v803
        %v805 = vand.u32 %v804, 4294901760
        %806 = vmatpush.msra.mxu0 %v805
        %v807 = vand.u32 %v542, 4294901760
        %v808 = vsub.f32 %v542, %v807
        %v809 = vand.u32 %v808, 4294901760
        %810 = vmatpush.msra.mxu0 %v809
        %v811 = vand.u32 %v538, 4294901760
        %v812 = vsub.f32 %v538, %v811
        %v813 = vand.u32 %v812, 4294901760
        %814 = vmatpush.msra.mxu0 %v813
        %v815 = vand.u32 %v580, 4294901760
        %816 = vmatmul.f32.gmra.mxu0 %v815
        %v817 = vpop.f32.mrf.mxu0
        %v818 = vadd.f32 %v767, %v817
        %v819 = vand.u32 %v583, 4294901760
        %820 = vmatmul.f32.gmra.mxu0 %v819
        %v821 = vpop.f32.mrf.mxu0
        %v822 = vadd.f32 %v773, %v821
        %v823 = vand.u32 %v586, 4294901760
        %824 = vmatmul.f32.gmra.mxu0 %v823
        %v825 = vpop.f32.mrf.mxu0
        %v826 = vadd.f32 %v779, %v825
        %v827 = vand.u32 %v589, 4294901760
        %828 = vmatmul.f32.gmra.mxu0 %v827
        %v829 = vpop.f32.mrf.mxu0
        %v830 = vadd.f32 %v785, %v829
        %831 = vdwg.mxu0
        %832 = vmatpush.msra.mxu0 0.0
        %833 = vmatpush.msra.mxu0 0.0
        %834 = vmatpush.msra.mxu0 0.0
        %835 = vmatpush.msra.mxu0 0.0
        %836 = vmatpush.msra.mxu0 0.0
        %837 = vmatpush.msra.mxu0 0.0
        %838 = vmatpush.msra.mxu0 0.0
        %839 = vmatpush.msra.mxu0 0.0
        %840 = vmatpush.msra.mxu0 0.0
        %841 = vmatpush.msra.mxu0 0.0
        %842 = vmatpush.msra.mxu0 0.0
        %843 = vmatpush.msra.mxu0 0.0
        %v844 = vand.u32 %v550, 4294901760
        %845 = vmatpush.msra.mxu0 %v844
        %v846 = vand.u32 %v546, 4294901760
        %847 = vmatpush.msra.mxu0 %v846
        %v848 = vand.u32 %v542, 4294901760
        %849 = vmatpush.msra.mxu0 %v848
        %v850 = vand.u32 %v538, 4294901760
        %851 = vmatpush.msra.mxu0 %v850
        %v852 = vand.u32 %v580, 4294901760
        %853 = vmatmul.f32.gmra.mxu0 %v852
        %v854 = vpop.f32.mrf.mxu0
        %v855 = vadd.f32 %v818, %v854
        %v856 = vand.u32 %v583, 4294901760
        %857 = vmatmul.f32.gmra.mxu0 %v856
        %v858 = vpop.f32.mrf.mxu0
        %v859 = vadd.f32 %v822, %v858
        %v860 = vand.u32 %v586, 4294901760
        %861 = vmatmul.f32.gmra.mxu0 %v860
        %v862 = vpop.f32.mrf.mxu0
        %v863 = vadd.f32 %v826, %v862
        %v864 = vand.u32 %v589, 4294901760
        %865 = vmatmul.f32.gmra.mxu0 %v864
        %v866 = vpop.f32.mrf.mxu0
        %v867 = vadd.f32 %v830, %v866
        %868 = vdwg.mxu0
        %869 = vmatpush.msra.mxu0 0.0
        %870 = vmatpush.msra.mxu0 0.0
        %871 = vmatpush.msra.mxu0 0.0
        %872 = vmatpush.msra.mxu0 0.0
        %873 = vmatpush.msra.mxu0 0.0
        %874 = vmatpush.msra.mxu0 0.0
        %875 = vmatpush.msra.mxu0 0.0
        %876 = vmatpush.msra.mxu0 0.0
        %877 = vmatpush.msra.mxu0 0.0
        %878 = vmatpush.msra.mxu0 0.0
        %879 = vmatpush.msra.mxu0 0.0
        %880 = vmatpush.msra.mxu0 0.0
        %v881 = vand.u32 %v551, 4294901760
        %882 = vmatpush.msra.mxu0 %v881
        %v883 = vand.u32 %v547, 4294901760
        %884 = vmatpush.msra.mxu0 %v883
        %v885 = vand.u32 %v543, 4294901760
        %886 = vmatpush.msra.mxu0 %v885
        %v887 = vand.u32 %v539, 4294901760
        %888 = vmatpush.msra.mxu0 %v887
        %v889 = vand.u32 %v580, 4294901760
        %v890 = vsub.f32 %v580, %v889
        %v891 = vand.u32 %v890, 4294901760
        %v892 = vsub.f32 %v890, %v891
        %v893 = vand.u32 %v892, 4294901760
        %894 = vmatmul.f32.gmra.mxu0 %v893
        %v895 = vpop.f32.mrf.mxu0
        %v896 = vadd.f32 %v561, %v895
        %v897 = vand.u32 %v583, 4294901760
        %v898 = vsub.f32 %v583, %v897
        %v899 = vand.u32 %v898, 4294901760
        %v900 = vsub.f32 %v898, %v899
        %v901 = vand.u32 %v900, 4294901760
        %902 = vmatmul.f32.gmra.mxu0 %v901
        %v903 = vpop.f32.mrf.mxu0
        %v904 = vadd.f32 %v566, %v903
        %v905 = vand.u32 %v586, 4294901760
        %v906 = vsub.f32 %v586, %v905
        %v907 = vand.u32 %v906, 4294901760
        %v908 = vsub.f32 %v906, %v907
        %v909 = vand.u32 %v908, 4294901760
        %910 = vmatmul.f32.gmra.mxu0 %v909
        %v911 = vpop.f32.mrf.mxu0
        %v912 = vadd.f32 %v571, %v911
        %v913 = vand.u32 %v589, 4294901760
        %v914 = vsub.f32 %v589, %v913
        %v915 = vand.u32 %v914, 4294901760
        %v916 = vsub.f32 %v914, %v915
        %v917 = vand.u32 %v916, 4294901760
        %918 = vmatmul.f32.gmra.mxu0 %v917
        %v919 = vpop.f32.mrf.mxu0
        %v920 = vadd.f32 %v576, %v919
        %921 = vdwg.mxu0
        %922 = vmatpush.msra.mxu0 0.0
        %923 = vmatpush.msra.mxu0 0.0
        %924 = vmatpush.msra.mxu0 0.0
        %925 = vmatpush.msra.mxu0 0.0
        %926 = vmatpush.msra.mxu0 0.0
        %927 = vmatpush.msra.mxu0 0.0
        %928 = vmatpush.msra.mxu0 0.0
        %929 = vmatpush.msra.mxu0 0.0
        %930 = vmatpush.msra.mxu0 0.0
        %931 = vmatpush.msra.mxu0 0.0
        %932 = vmatpush.msra.mxu0 0.0
        %933 = vmatpush.msra.mxu0 0.0
        %v934 = vand.u32 %v551, 4294901760
        %v935 = vsub.f32 %v551, %v934
        %v936 = vand.u32 %v935, 4294901760
        %v937 = vsub.f32 %v935, %v936
        %v938 = vand.u32 %v937, 4294901760
        %939 = vmatpush.msra.mxu0 %v938
        %v940 = vand.u32 %v547, 4294901760
        %v941 = vsub.f32 %v547, %v940
        %v942 = vand.u32 %v941, 4294901760
        %v943 = vsub.f32 %v941, %v942
        %v944 = vand.u32 %v943, 4294901760
        %945 = vmatpush.msra.mxu0 %v944
        %v946 = vand.u32 %v543, 4294901760
        %v947 = vsub.f32 %v543, %v946
        %v948 = vand.u32 %v947, 4294901760
        %v949 = vsub.f32 %v947, %v948
        %v950 = vand.u32 %v949, 4294901760
        %951 = vmatpush.msra.mxu0 %v950
        %v952 = vand.u32 %v539, 4294901760
        %v953 = vsub.f32 %v539, %v952
        %v954 = vand.u32 %v953, 4294901760
        %v955 = vsub.f32 %v953, %v954
        %v956 = vand.u32 %v955, 4294901760
        %957 = vmatpush.msra.mxu0 %v956
        %v958 = vand.u32 %v580, 4294901760
        %959 = vmatmul.f32.gmra.mxu0 %v958
        %v960 = vpop.f32.mrf.mxu0
        %v961 = vadd.f32 %v896, %v960
        %v962 = vand.u32 %v583, 4294901760
        %963 = vmatmul.f32.gmra.mxu0 %v962
        %v964 = vpop.f32.mrf.mxu0
        %v965 = vadd.f32 %v904, %v964
        %v966 = vand.u32 %v586, 4294901760
        %967 = vmatmul.f32.gmra.mxu0 %v966
        %v968 = vpop.f32.mrf.mxu0
        %v969 = vadd.f32 %v912, %v968
        %v970 = vand.u32 %v589, 4294901760
        %971 = vmatmul.f32.gmra.mxu0 %v970
        %v972 = vpop.f32.mrf.mxu0
        %v973 = vadd.f32 %v920, %v972
        %974 = vdwg.mxu0
        %975 = vmatpush.msra.mxu0 0.0
        %976 = vmatpush.msra.mxu0 0.0
        %977 = vmatpush.msra.mxu0 0.0
        %978 = vmatpush.msra.mxu0 0.0
        %979 = vmatpush.msra.mxu0 0.0
        %980 = vmatpush.msra.mxu0 0.0
        %981 = vmatpush.msra.mxu0 0.0
        %982 = vmatpush.msra.mxu0 0.0
        %983 = vmatpush.msra.mxu0 0.0
        %984 = vmatpush.msra.mxu0 0.0
        %985 = vmatpush.msra.mxu0 0.0
        %986 = vmatpush.msra.mxu0 0.0
        %v987 = vand.u32 %v551, 4294901760
        %v988 = vsub.f32 %v551, %v987
        %989 = vmatpush.msra.mxu0 %v988
        %v990 = vand.u32 %v547, 4294901760
        %v991 = vsub.f32 %v547, %v990
        %992 = vmatpush.msra.mxu0 %v991
        %v993 = vand.u32 %v543, 4294901760
        %v994 = vsub.f32 %v543, %v993
        %995 = vmatpush.msra.mxu0 %v994
        %v996 = vand.u32 %v539, 4294901760
        %v997 = vsub.f32 %v539, %v996
        %998 = vmatpush.msra.mxu0 %v997
        %v999 = vand.u32 %v580, 4294901760
        %v1000 = vsub.f32 %v580, %v999
        %1001 = vmatmul.f32.gmra.mxu0 %v1000
        %v1002 = vpop.f32.mrf.mxu0
        %v1003 = vadd.f32 %v961, %v1002
        %v1004 = vand.u32 %v583, 4294901760
        %v1005 = vsub.f32 %v583, %v1004
        %1006 = vmatmul.f32.gmra.mxu0 %v1005
        %v1007 = vpop.f32.mrf.mxu0
        %v1008 = vadd.f32 %v965, %v1007
        %v1009 = vand.u32 %v586, 4294901760
        %v1010 = vsub.f32 %v586, %v1009
        %1011 = vmatmul.f32.gmra.mxu0 %v1010
        %v1012 = vpop.f32.mrf.mxu0
        %v1013 = vadd.f32 %v969, %v1012
        %v1014 = vand.u32 %v589, 4294901760
        %v1015 = vsub.f32 %v589, %v1014
        %1016 = vmatmul.f32.gmra.mxu0 %v1015
        %v1017 = vpop.f32.mrf.mxu0
        %v1018 = vadd.f32 %v973, %v1017
        %1019 = vdwg.mxu0
        %1020 = vmatpush.msra.mxu0 0.0
        %1021 = vmatpush.msra.mxu0 0.0
        %1022 = vmatpush.msra.mxu0 0.0
        %1023 = vmatpush.msra.mxu0 0.0
        %1024 = vmatpush.msra.mxu0 0.0
        %1025 = vmatpush.msra.mxu0 0.0
        %1026 = vmatpush.msra.mxu0 0.0
        %1027 = vmatpush.msra.mxu0 0.0
        %1028 = vmatpush.msra.mxu0 0.0
        %1029 = vmatpush.msra.mxu0 0.0
        %1030 = vmatpush.msra.mxu0 0.0
        %1031 = vmatpush.msra.mxu0 0.0
        %v1032 = vand.u32 %v551, 4294901760
        %1033 = vmatpush.msra.mxu0 %v1032
        %v1034 = vand.u32 %v547, 4294901760
        %1035 = vmatpush.msra.mxu0 %v1034
        %v1036 = vand.u32 %v543, 4294901760
        %1037 = vmatpush.msra.mxu0 %v1036
        %v1038 = vand.u32 %v539, 4294901760
        %1039 = vmatpush.msra.mxu0 %v1038
        %v1040 = vand.u32 %v580, 4294901760
        %v1041 = vsub.f32 %v580, %v1040
        %v1042 = vand.u32 %v1041, 4294901760
        %1043 = vmatmul.f32.gmra.mxu0 %v1042
        %v1044 = vpop.f32.mrf.mxu0
        %v1045 = vadd.f32 %v1003, %v1044
        %v1046 = vand.u32 %v583, 4294901760
        %v1047 = vsub.f32 %v583, %v1046
        %v1048 = vand.u32 %v1047, 4294901760
        %1049 = vmatmul.f32.gmra.mxu0 %v1048
        %v1050 = vpop.f32.mrf.mxu0
        %v1051 = vadd.f32 %v1008, %v1050
        %v1052 = vand.u32 %v586, 4294901760
        %v1053 = vsub.f32 %v586, %v1052
        %v1054 = vand.u32 %v1053, 4294901760
        %1055 = vmatmul.f32.gmra.mxu0 %v1054
        %v1056 = vpop.f32.mrf.mxu0
        %v1057 = vadd.f32 %v1013, %v1056
        %v1058 = vand.u32 %v589, 4294901760
        %v1059 = vsub.f32 %v589, %v1058
        %v1060 = vand.u32 %v1059, 4294901760
        %1061 = vmatmul.f32.gmra.mxu0 %v1060
        %v1062 = vpop.f32.mrf.mxu0
        %v1063 = vadd.f32 %v1018, %v1062
        %1064 = vdwg.mxu0
        %1065 = vmatpush.msra.mxu0 0.0
        %1066 = vmatpush.msra.mxu0 0.0
        %1067 = vmatpush.msra.mxu0 0.0
        %1068 = vmatpush.msra.mxu0 0.0
        %1069 = vmatpush.msra.mxu0 0.0
        %1070 = vmatpush.msra.mxu0 0.0
        %1071 = vmatpush.msra.mxu0 0.0
        %1072 = vmatpush.msra.mxu0 0.0
        %1073 = vmatpush.msra.mxu0 0.0
        %1074 = vmatpush.msra.mxu0 0.0
        %1075 = vmatpush.msra.mxu0 0.0
        %1076 = vmatpush.msra.mxu0 0.0
        %v1077 = vand.u32 %v551, 4294901760
        %v1078 = vsub.f32 %v551, %v1077
        %v1079 = vand.u32 %v1078, 4294901760
        %1080 = vmatpush.msra.mxu0 %v1079
        %v1081 = vand.u32 %v547, 4294901760
        %v1082 = vsub.f32 %v547, %v1081
        %v1083 = vand.u32 %v1082, 4294901760
        %1084 = vmatpush.msra.mxu0 %v1083
        %v1085 = vand.u32 %v543, 4294901760
        %v1086 = vsub.f32 %v543, %v1085
        %v1087 = vand.u32 %v1086, 4294901760
        %1088 = vmatpush.msra.mxu0 %v1087
        %v1089 = vand.u32 %v539, 4294901760
        %v1090 = vsub.f32 %v539, %v1089
        %v1091 = vand.u32 %v1090, 4294901760
        %1092 = vmatpush.msra.mxu0 %v1091
        %v1093 = vand.u32 %v580, 4294901760
        %1094 = vmatmul.f32.gmra.mxu0 %v1093
        %v1095 = vpop.f32.mrf.mxu0
        %v1096 = vadd.f32 %v1045, %v1095
        %v1097 = vand.u32 %v583, 4294901760
        %1098 = vmatmul.f32.gmra.mxu0 %v1097
        %v1099 = vpop.f32.mrf.mxu0
        %v1100 = vadd.f32 %v1051, %v1099
        %v1101 = vand.u32 %v586, 4294901760
        %1102 = vmatmul.f32.gmra.mxu0 %v1101
        %v1103 = vpop.f32.mrf.mxu0
        %v1104 = vadd.f32 %v1057, %v1103
        %v1105 = vand.u32 %v589, 4294901760
        %1106 = vmatmul.f32.gmra.mxu0 %v1105
        %v1107 = vpop.f32.mrf.mxu0
        %v1108 = vadd.f32 %v1063, %v1107
        %1109 = vdwg.mxu0
        %1110 = vmatpush.msra.mxu0 0.0
        %1111 = vmatpush.msra.mxu0 0.0
        %1112 = vmatpush.msra.mxu0 0.0
        %1113 = vmatpush.msra.mxu0 0.0
        %1114 = vmatpush.msra.mxu0 0.0
        %1115 = vmatpush.msra.mxu0 0.0
        %1116 = vmatpush.msra.mxu0 0.0
        %1117 = vmatpush.msra.mxu0 0.0
        %1118 = vmatpush.msra.mxu0 0.0
        %1119 = vmatpush.msra.mxu0 0.0
        %1120 = vmatpush.msra.mxu0 0.0
        %1121 = vmatpush.msra.mxu0 0.0
        %v1122 = vand.u32 %v551, 4294901760
        %1123 = vmatpush.msra.mxu0 %v1122
        %v1124 = vand.u32 %v547, 4294901760
        %1125 = vmatpush.msra.mxu0 %v1124
        %v1126 = vand.u32 %v543, 4294901760
        %1127 = vmatpush.msra.mxu0 %v1126
        %v1128 = vand.u32 %v539, 4294901760
        %1129 = vmatpush.msra.mxu0 %v1128
        %v1130 = vand.u32 %v580, 4294901760
        %1131 = vmatmul.f32.gmra.mxu0 %v1130
        %v1132 = vpop.f32.mrf.mxu0
        %v1133 = vadd.f32 %v1096, %v1132
        %v1134 = vand.u32 %v583, 4294901760
        %1135 = vmatmul.f32.gmra.mxu0 %v1134
        %v1136 = vpop.f32.mrf.mxu0
        %v1137 = vadd.f32 %v1100, %v1136
        %v1138 = vand.u32 %v586, 4294901760
        %1139 = vmatmul.f32.gmra.mxu0 %v1138
        %v1140 = vpop.f32.mrf.mxu0
        %v1141 = vadd.f32 %v1104, %v1140
        %v1142 = vand.u32 %v589, 4294901760
        %1143 = vmatmul.f32.gmra.mxu0 %v1142
        %v1144 = vpop.f32.mrf.mxu0
        %v1145 = vadd.f32 %v1108, %v1144
        %1146 = vdwg.mxu0
        %1147 = vmatpush.msra.mxu0 0.0
        %1148 = vmatpush.msra.mxu0 0.0
        %1149 = vmatpush.msra.mxu0 0.0
        %1150 = vmatpush.msra.mxu0 0.0
        %1151 = vmatpush.msra.mxu0 0.0
        %1152 = vmatpush.msra.mxu0 0.0
        %1153 = vmatpush.msra.mxu0 0.0
        %1154 = vmatpush.msra.mxu0 0.0
        %1155 = vmatpush.msra.mxu0 0.0
        %1156 = vmatpush.msra.mxu0 0.0
        %1157 = vmatpush.msra.mxu0 0.0
        %1158 = vmatpush.msra.mxu0 0.0
        %v1159 = vand.u32 %v552, 4294901760
        %1160 = vmatpush.msra.mxu0 %v1159
        %v1161 = vand.u32 %v548, 4294901760
        %1162 = vmatpush.msra.mxu0 %v1161
        %v1163 = vand.u32 %v544, 4294901760
        %1164 = vmatpush.msra.mxu0 %v1163
        %v1165 = vand.u32 %v540, 4294901760
        %1166 = vmatpush.msra.mxu0 %v1165
        %v1167 = vand.u32 %v580, 4294901760
        %v1168 = vsub.f32 %v580, %v1167
        %v1169 = vand.u32 %v1168, 4294901760
        %v1170 = vsub.f32 %v1168, %v1169
        %v1171 = vand.u32 %v1170, 4294901760
        %1172 = vmatmul.f32.gmra.mxu0 %v1171
        %v1173 = vpop.f32.mrf.mxu0
        %v1174 = vadd.f32 %v561, %v1173
        %v1175 = vand.u32 %v583, 4294901760
        %v1176 = vsub.f32 %v583, %v1175
        %v1177 = vand.u32 %v1176, 4294901760
        %v1178 = vsub.f32 %v1176, %v1177
        %v1179 = vand.u32 %v1178, 4294901760
        %1180 = vmatmul.f32.gmra.mxu0 %v1179
        %v1181 = vpop.f32.mrf.mxu0
        %v1182 = vadd.f32 %v566, %v1181
        %v1183 = vand.u32 %v586, 4294901760
        %v1184 = vsub.f32 %v586, %v1183
        %v1185 = vand.u32 %v1184, 4294901760
        %v1186 = vsub.f32 %v1184, %v1185
        %v1187 = vand.u32 %v1186, 4294901760
        %1188 = vmatmul.f32.gmra.mxu0 %v1187
        %v1189 = vpop.f32.mrf.mxu0
        %v1190 = vadd.f32 %v571, %v1189
        %v1191 = vand.u32 %v589, 4294901760
        %v1192 = vsub.f32 %v589, %v1191
        %v1193 = vand.u32 %v1192, 4294901760
        %v1194 = vsub.f32 %v1192, %v1193
        %v1195 = vand.u32 %v1194, 4294901760
        %1196 = vmatmul.f32.gmra.mxu0 %v1195
        %v1197 = vpop.f32.mrf.mxu0
        %v1198 = vadd.f32 %v576, %v1197
        %1199 = vdwg.mxu0
        %1200 = vmatpush.msra.mxu0 0.0
        %1201 = vmatpush.msra.mxu0 0.0
        %1202 = vmatpush.msra.mxu0 0.0
        %1203 = vmatpush.msra.mxu0 0.0
        %1204 = vmatpush.msra.mxu0 0.0
        %1205 = vmatpush.msra.mxu0 0.0
        %1206 = vmatpush.msra.mxu0 0.0
        %1207 = vmatpush.msra.mxu0 0.0
        %1208 = vmatpush.msra.mxu0 0.0
        %1209 = vmatpush.msra.mxu0 0.0
        %1210 = vmatpush.msra.mxu0 0.0
        %1211 = vmatpush.msra.mxu0 0.0
        %v1212 = vand.u32 %v552, 4294901760
        %v1213 = vsub.f32 %v552, %v1212
        %v1214 = vand.u32 %v1213, 4294901760
        %v1215 = vsub.f32 %v1213, %v1214
        %v1216 = vand.u32 %v1215, 4294901760
        %1217 = vmatpush.msra.mxu0 %v1216
        %v1218 = vand.u32 %v548, 4294901760
        %v1219 = vsub.f32 %v548, %v1218
        %v1220 = vand.u32 %v1219, 4294901760
        %v1221 = vsub.f32 %v1219, %v1220
        %v1222 = vand.u32 %v1221, 4294901760
        %1223 = vmatpush.msra.mxu0 %v1222
        %v1224 = vand.u32 %v544, 4294901760
        %v1225 = vsub.f32 %v544, %v1224
        %v1226 = vand.u32 %v1225, 4294901760
        %v1227 = vsub.f32 %v1225, %v1226
        %v1228 = vand.u32 %v1227, 4294901760
        %1229 = vmatpush.msra.mxu0 %v1228
        %v1230 = vand.u32 %v540, 4294901760
        %v1231 = vsub.f32 %v540, %v1230
        %v1232 = vand.u32 %v1231, 4294901760
        %v1233 = vsub.f32 %v1231, %v1232
        %v1234 = vand.u32 %v1233, 4294901760
        %1235 = vmatpush.msra.mxu0 %v1234
        %v1236 = vand.u32 %v580, 4294901760
        %1237 = vmatmul.f32.gmra.mxu0 %v1236
        %v1238 = vpop.f32.mrf.mxu0
        %v1239 = vadd.f32 %v1174, %v1238
        %v1240 = vand.u32 %v583, 4294901760
        %1241 = vmatmul.f32.gmra.mxu0 %v1240
        %v1242 = vpop.f32.mrf.mxu0
        %v1243 = vadd.f32 %v1182, %v1242
        %v1244 = vand.u32 %v586, 4294901760
        %1245 = vmatmul.f32.gmra.mxu0 %v1244
        %v1246 = vpop.f32.mrf.mxu0
        %v1247 = vadd.f32 %v1190, %v1246
        %v1248 = vand.u32 %v589, 4294901760
        %1249 = vmatmul.f32.gmra.mxu0 %v1248
        %v1250 = vpop.f32.mrf.mxu0
        %v1251 = vadd.f32 %v1198, %v1250
        %1252 = vdwg.mxu0
        %1253 = vmatpush.msra.mxu0 0.0
        %1254 = vmatpush.msra.mxu0 0.0
        %1255 = vmatpush.msra.mxu0 0.0
        %1256 = vmatpush.msra.mxu0 0.0
        %1257 = vmatpush.msra.mxu0 0.0
        %1258 = vmatpush.msra.mxu0 0.0
        %1259 = vmatpush.msra.mxu0 0.0
        %1260 = vmatpush.msra.mxu0 0.0
        %1261 = vmatpush.msra.mxu0 0.0
        %1262 = vmatpush.msra.mxu0 0.0
        %1263 = vmatpush.msra.mxu0 0.0
        %1264 = vmatpush.msra.mxu0 0.0
        %v1265 = vand.u32 %v552, 4294901760
        %v1266 = vsub.f32 %v552, %v1265
        %1267 = vmatpush.msra.mxu0 %v1266
        %v1268 = vand.u32 %v548, 4294901760
        %v1269 = vsub.f32 %v548, %v1268
        %1270 = vmatpush.msra.mxu0 %v1269
        %v1271 = vand.u32 %v544, 4294901760
        %v1272 = vsub.f32 %v544, %v1271
        %1273 = vmatpush.msra.mxu0 %v1272
        %v1274 = vand.u32 %v540, 4294901760
        %v1275 = vsub.f32 %v540, %v1274
        %1276 = vmatpush.msra.mxu0 %v1275
        %v1277 = vand.u32 %v580, 4294901760
        %v1278 = vsub.f32 %v580, %v1277
        %1279 = vmatmul.f32.gmra.mxu0 %v1278
        %v1280 = vpop.f32.mrf.mxu0
        %v1281 = vadd.f32 %v1239, %v1280
        %v1282 = vand.u32 %v583, 4294901760
        %v1283 = vsub.f32 %v583, %v1282
        %1284 = vmatmul.f32.gmra.mxu0 %v1283
        %v1285 = vpop.f32.mrf.mxu0
        %v1286 = vadd.f32 %v1243, %v1285
        %v1287 = vand.u32 %v586, 4294901760
        %v1288 = vsub.f32 %v586, %v1287
        %1289 = vmatmul.f32.gmra.mxu0 %v1288
        %v1290 = vpop.f32.mrf.mxu0
        %v1291 = vadd.f32 %v1247, %v1290
        %v1292 = vand.u32 %v589, 4294901760
        %v1293 = vsub.f32 %v589, %v1292
        %1294 = vmatmul.f32.gmra.mxu0 %v1293
        %v1295 = vpop.f32.mrf.mxu0
        %v1296 = vadd.f32 %v1251, %v1295
        %1297 = vdwg.mxu0
        %1298 = vmatpush.msra.mxu0 0.0
        %1299 = vmatpush.msra.mxu0 0.0
        %1300 = vmatpush.msra.mxu0 0.0
        %1301 = vmatpush.msra.mxu0 0.0
        %1302 = vmatpush.msra.mxu0 0.0
        %1303 = vmatpush.msra.mxu0 0.0
        %1304 = vmatpush.msra.mxu0 0.0
        %1305 = vmatpush.msra.mxu0 0.0
        %1306 = vmatpush.msra.mxu0 0.0
        %1307 = vmatpush.msra.mxu0 0.0
        %1308 = vmatpush.msra.mxu0 0.0
        %1309 = vmatpush.msra.mxu0 0.0
        %v1310 = vand.u32 %v552, 4294901760
        %1311 = vmatpush.msra.mxu0 %v1310
        %v1312 = vand.u32 %v548, 4294901760
        %1313 = vmatpush.msra.mxu0 %v1312
        %v1314 = vand.u32 %v544, 4294901760
        %1315 = vmatpush.msra.mxu0 %v1314
        %v1316 = vand.u32 %v540, 4294901760
        %1317 = vmatpush.msra.mxu0 %v1316
        %v1318 = vand.u32 %v580, 4294901760
        %v1319 = vsub.f32 %v580, %v1318
        %v1320 = vand.u32 %v1319, 4294901760
        %1321 = vmatmul.f32.gmra.mxu0 %v1320
        %v1322 = vpop.f32.mrf.mxu0
        %v1323 = vadd.f32 %v1281, %v1322
        %v1324 = vand.u32 %v583, 4294901760
        %v1325 = vsub.f32 %v583, %v1324
        %v1326 = vand.u32 %v1325, 4294901760
        %1327 = vmatmul.f32.gmra.mxu0 %v1326
        %v1328 = vpop.f32.mrf.mxu0
        %v1329 = vadd.f32 %v1286, %v1328
        %v1330 = vand.u32 %v586, 4294901760
        %v1331 = vsub.f32 %v586, %v1330
        %v1332 = vand.u32 %v1331, 4294901760
        %1333 = vmatmul.f32.gmra.mxu0 %v1332
        %v1334 = vpop.f32.mrf.mxu0
        %v1335 = vadd.f32 %v1291, %v1334
        %v1336 = vand.u32 %v589, 4294901760
        %v1337 = vsub.f32 %v589, %v1336
        %v1338 = vand.u32 %v1337, 4294901760
        %1339 = vmatmul.f32.gmra.mxu0 %v1338
        %v1340 = vpop.f32.mrf.mxu0
        %v1341 = vadd.f32 %v1296, %v1340
        %1342 = vdwg.mxu0
        %1343 = vmatpush.msra.mxu0 0.0
        %1344 = vmatpush.msra.mxu0 0.0
        %1345 = vmatpush.msra.mxu0 0.0
        %1346 = vmatpush.msra.mxu0 0.0
        %1347 = vmatpush.msra.mxu0 0.0
        %1348 = vmatpush.msra.mxu0 0.0
        %1349 = vmatpush.msra.mxu0 0.0
        %1350 = vmatpush.msra.mxu0 0.0
        %1351 = vmatpush.msra.mxu0 0.0
        %1352 = vmatpush.msra.mxu0 0.0
        %1353 = vmatpush.msra.mxu0 0.0
        %1354 = vmatpush.msra.mxu0 0.0
        %v1355 = vand.u32 %v552, 4294901760
        %v1356 = vsub.f32 %v552, %v1355
        %v1357 = vand.u32 %v1356, 4294901760
        %1358 = vmatpush.msra.mxu0 %v1357
        %v1359 = vand.u32 %v548, 4294901760
        %v1360 = vsub.f32 %v548, %v1359
        %v1361 = vand.u32 %v1360, 4294901760
        %1362 = vmatpush.msra.mxu0 %v1361
        %v1363 = vand.u32 %v544, 4294901760
        %v1364 = vsub.f32 %v544, %v1363
        %v1365 = vand.u32 %v1364, 4294901760
        %1366 = vmatpush.msra.mxu0 %v1365
        %v1367 = vand.u32 %v540, 4294901760
        %v1368 = vsub.f32 %v540, %v1367
        %v1369 = vand.u32 %v1368, 4294901760
        %1370 = vmatpush.msra.mxu0 %v1369
        %v1371 = vand.u32 %v580, 4294901760
        %1372 = vmatmul.f32.gmra.mxu0 %v1371
        %v1373 = vpop.f32.mrf.mxu0
        %v1374 = vadd.f32 %v1323, %v1373
        %v1375 = vand.u32 %v583, 4294901760
        %1376 = vmatmul.f32.gmra.mxu0 %v1375
        %v1377 = vpop.f32.mrf.mxu0
        %v1378 = vadd.f32 %v1329, %v1377
        %v1379 = vand.u32 %v586, 4294901760
        %1380 = vmatmul.f32.gmra.mxu0 %v1379
        %v1381 = vpop.f32.mrf.mxu0
        %v1382 = vadd.f32 %v1335, %v1381
        %v1383 = vand.u32 %v589, 4294901760
        %1384 = vmatmul.f32.gmra.mxu0 %v1383
        %v1385 = vpop.f32.mrf.mxu0
        %v1386 = vadd.f32 %v1341, %v1385
        %1387 = vdwg.mxu0
        %1388 = vmatpush.msra.mxu0 0.0
        %1389 = vmatpush.msra.mxu0 0.0
        %1390 = vmatpush.msra.mxu0 0.0
        %1391 = vmatpush.msra.mxu0 0.0
        %1392 = vmatpush.msra.mxu0 0.0
        %1393 = vmatpush.msra.mxu0 0.0
        %1394 = vmatpush.msra.mxu0 0.0
        %1395 = vmatpush.msra.mxu0 0.0
        %1396 = vmatpush.msra.mxu0 0.0
        %1397 = vmatpush.msra.mxu0 0.0
        %1398 = vmatpush.msra.mxu0 0.0
        %1399 = vmatpush.msra.mxu0 0.0
        %v1400 = vand.u32 %v552, 4294901760
        %1401 = vmatpush.msra.mxu0 %v1400
        %v1402 = vand.u32 %v548, 4294901760
        %1403 = vmatpush.msra.mxu0 %v1402
        %v1404 = vand.u32 %v544, 4294901760
        %1405 = vmatpush.msra.mxu0 %v1404
        %v1406 = vand.u32 %v540, 4294901760
        %1407 = vmatpush.msra.mxu0 %v1406
        %v1408 = vand.u32 %v580, 4294901760
        %1409 = vmatmul.f32.gmra.mxu0 %v1408
        %v1410 = vpop.f32.mrf.mxu0
        %v1411 = vadd.f32 %v1374, %v1410
        %v1412 = vand.u32 %v583, 4294901760
        %1413 = vmatmul.f32.gmra.mxu0 %v1412
        %v1414 = vpop.f32.mrf.mxu0
        %v1415 = vadd.f32 %v1378, %v1414
        %v1416 = vand.u32 %v586, 4294901760
        %1417 = vmatmul.f32.gmra.mxu0 %v1416
        %v1418 = vpop.f32.mrf.mxu0
        %v1419 = vadd.f32 %v1382, %v1418
        %v1420 = vand.u32 %v589, 4294901760
        %1421 = vmatmul.f32.gmra.mxu0 %v1420
        %v1422 = vpop.f32.mrf.mxu0
        %v1423 = vadd.f32 %v1386, %v1422
        %1424 = vdwg.mxu0
        %1425 = vmatpush.msra.mxu0 0.0
        %1426 = vmatpush.msra.mxu0 0.0
        %1427 = vmatpush.msra.mxu0 0.0
        %1428 = vmatpush.msra.mxu0 0.0
        %1429 = vmatpush.msra.mxu0 0.0
        %1430 = vmatpush.msra.mxu0 0.0
        %1431 = vmatpush.msra.mxu0 0.0
        %1432 = vmatpush.msra.mxu0 0.0
        %1433 = vmatpush.msra.mxu0 0.0
        %1434 = vmatpush.msra.mxu0 0.0
        %1435 = vmatpush.msra.mxu0 0.0
        %1436 = vmatpush.msra.mxu0 0.0
        %v1437 = vand.u32 %v553, 4294901760
        %1438 = vmatpush.msra.mxu0 %v1437
        %v1439 = vand.u32 %v549, 4294901760
        %1440 = vmatpush.msra.mxu0 %v1439
        %v1441 = vand.u32 %v545, 4294901760
        %1442 = vmatpush.msra.mxu0 %v1441
        %v1443 = vand.u32 %v541, 4294901760
        %1444 = vmatpush.msra.mxu0 %v1443
        %v1445 = vand.u32 %v580, 4294901760
        %v1446 = vsub.f32 %v580, %v1445
        %v1447 = vand.u32 %v1446, 4294901760
        %v1448 = vsub.f32 %v1446, %v1447
        %v1449 = vand.u32 %v1448, 4294901760
        %1450 = vmatmul.f32.gmra.mxu0 %v1449
        %v1451 = vpop.f32.mrf.mxu0
        %v1452 = vadd.f32 %v561, %v1451
        %v1453 = vand.u32 %v583, 4294901760
        %v1454 = vsub.f32 %v583, %v1453
        %v1455 = vand.u32 %v1454, 4294901760
        %v1456 = vsub.f32 %v1454, %v1455
        %v1457 = vand.u32 %v1456, 4294901760
        %1458 = vmatmul.f32.gmra.mxu0 %v1457
        %v1459 = vpop.f32.mrf.mxu0
        %v1460 = vadd.f32 %v566, %v1459
        %v1461 = vand.u32 %v586, 4294901760
        %v1462 = vsub.f32 %v586, %v1461
        %v1463 = vand.u32 %v1462, 4294901760
        %v1464 = vsub.f32 %v1462, %v1463
        %v1465 = vand.u32 %v1464, 4294901760
        %1466 = vmatmul.f32.gmra.mxu0 %v1465
        %v1467 = vpop.f32.mrf.mxu0
        %v1468 = vadd.f32 %v571, %v1467
        %v1469 = vand.u32 %v589, 4294901760
        %v1470 = vsub.f32 %v589, %v1469
        %v1471 = vand.u32 %v1470, 4294901760
        %v1472 = vsub.f32 %v1470, %v1471
        %v1473 = vand.u32 %v1472, 4294901760
        %1474 = vmatmul.f32.gmra.mxu0 %v1473
        %v1475 = vpop.f32.mrf.mxu0
        %v1476 = vadd.f32 %v576, %v1475
        %1477 = vdwg.mxu0
        %1478 = vmatpush.msra.mxu0 0.0
        %1479 = vmatpush.msra.mxu0 0.0
        %1480 = vmatpush.msra.mxu0 0.0
        %1481 = vmatpush.msra.mxu0 0.0
        %1482 = vmatpush.msra.mxu0 0.0
        %1483 = vmatpush.msra.mxu0 0.0
        %1484 = vmatpush.msra.mxu0 0.0
        %1485 = vmatpush.msra.mxu0 0.0
        %1486 = vmatpush.msra.mxu0 0.0
        %1487 = vmatpush.msra.mxu0 0.0
        %1488 = vmatpush.msra.mxu0 0.0
        %1489 = vmatpush.msra.mxu0 0.0
        %v1490 = vand.u32 %v553, 4294901760
        %v1491 = vsub.f32 %v553, %v1490
        %v1492 = vand.u32 %v1491, 4294901760
        %v1493 = vsub.f32 %v1491, %v1492
        %v1494 = vand.u32 %v1493, 4294901760
        %1495 = vmatpush.msra.mxu0 %v1494
        %v1496 = vand.u32 %v549, 4294901760
        %v1497 = vsub.f32 %v549, %v1496
        %v1498 = vand.u32 %v1497, 4294901760
        %v1499 = vsub.f32 %v1497, %v1498
        %v1500 = vand.u32 %v1499, 4294901760
        %1501 = vmatpush.msra.mxu0 %v1500
        %v1502 = vand.u32 %v545, 4294901760
        %v1503 = vsub.f32 %v545, %v1502
        %v1504 = vand.u32 %v1503, 4294901760
        %v1505 = vsub.f32 %v1503, %v1504
        %v1506 = vand.u32 %v1505, 4294901760
        %1507 = vmatpush.msra.mxu0 %v1506
        %v1508 = vand.u32 %v541, 4294901760
        %v1509 = vsub.f32 %v541, %v1508
        %v1510 = vand.u32 %v1509, 4294901760
        %v1511 = vsub.f32 %v1509, %v1510
        %v1512 = vand.u32 %v1511, 4294901760
        %1513 = vmatpush.msra.mxu0 %v1512
        %v1514 = vand.u32 %v580, 4294901760
        %1515 = vmatmul.f32.gmra.mxu0 %v1514
        %v1516 = vpop.f32.mrf.mxu0
        %v1517 = vadd.f32 %v1452, %v1516
        %v1518 = vand.u32 %v583, 4294901760
        %1519 = vmatmul.f32.gmra.mxu0 %v1518
        %v1520 = vpop.f32.mrf.mxu0
        %v1521 = vadd.f32 %v1460, %v1520
        %v1522 = vand.u32 %v586, 4294901760
        %1523 = vmatmul.f32.gmra.mxu0 %v1522
        %v1524 = vpop.f32.mrf.mxu0
        %v1525 = vadd.f32 %v1468, %v1524
        %v1526 = vand.u32 %v589, 4294901760
        %1527 = vmatmul.f32.gmra.mxu0 %v1526
        %v1528 = vpop.f32.mrf.mxu0
        %v1529 = vadd.f32 %v1476, %v1528
        %1530 = vdwg.mxu0
        %1531 = vmatpush.msra.mxu0 0.0
        %1532 = vmatpush.msra.mxu0 0.0
        %1533 = vmatpush.msra.mxu0 0.0
        %1534 = vmatpush.msra.mxu0 0.0
        %1535 = vmatpush.msra.mxu0 0.0
        %1536 = vmatpush.msra.mxu0 0.0
        %1537 = vmatpush.msra.mxu0 0.0
        %1538 = vmatpush.msra.mxu0 0.0
        %1539 = vmatpush.msra.mxu0 0.0
        %1540 = vmatpush.msra.mxu0 0.0
        %1541 = vmatpush.msra.mxu0 0.0
        %1542 = vmatpush.msra.mxu0 0.0
        %v1543 = vand.u32 %v553, 4294901760
        %v1544 = vsub.f32 %v553, %v1543
        %1545 = vmatpush.msra.mxu0 %v1544
        %v1546 = vand.u32 %v549, 4294901760
        %v1547 = vsub.f32 %v549, %v1546
        %1548 = vmatpush.msra.mxu0 %v1547
        %v1549 = vand.u32 %v545, 4294901760
        %v1550 = vsub.f32 %v545, %v1549
        %1551 = vmatpush.msra.mxu0 %v1550
        %v1552 = vand.u32 %v541, 4294901760
        %v1553 = vsub.f32 %v541, %v1552
        %1554 = vmatpush.msra.mxu0 %v1553
        %v1555 = vand.u32 %v580, 4294901760
        %v1556 = vsub.f32 %v580, %v1555
        %1557 = vmatmul.f32.gmra.mxu0 %v1556
        %v1558 = vpop.f32.mrf.mxu0
        %v1559 = vadd.f32 %v1517, %v1558
        %v1560 = vand.u32 %v583, 4294901760
        %v1561 = vsub.f32 %v583, %v1560
        %1562 = vmatmul.f32.gmra.mxu0 %v1561
        %v1563 = vpop.f32.mrf.mxu0
        %v1564 = vadd.f32 %v1521, %v1563
        %v1565 = vand.u32 %v586, 4294901760
        %v1566 = vsub.f32 %v586, %v1565
        %1567 = vmatmul.f32.gmra.mxu0 %v1566
        %v1568 = vpop.f32.mrf.mxu0
        %v1569 = vadd.f32 %v1525, %v1568
        %v1570 = vand.u32 %v589, 4294901760
        %v1571 = vsub.f32 %v589, %v1570
        %1572 = vmatmul.f32.gmra.mxu0 %v1571
        %v1573 = vpop.f32.mrf.mxu0
        %v1574 = vadd.f32 %v1529, %v1573
        %1575 = vdwg.mxu0
        %1576 = vmatpush.msra.mxu0 0.0
        %1577 = vmatpush.msra.mxu0 0.0
        %1578 = vmatpush.msra.mxu0 0.0
        %1579 = vmatpush.msra.mxu0 0.0
        %1580 = vmatpush.msra.mxu0 0.0
        %1581 = vmatpush.msra.mxu0 0.0
        %1582 = vmatpush.msra.mxu0 0.0
        %1583 = vmatpush.msra.mxu0 0.0
        %1584 = vmatpush.msra.mxu0 0.0
        %1585 = vmatpush.msra.mxu0 0.0
        %1586 = vmatpush.msra.mxu0 0.0
        %1587 = vmatpush.msra.mxu0 0.0
        %v1588 = vand.u32 %v553, 4294901760
        %1589 = vmatpush.msra.mxu0 %v1588
        %v1590 = vand.u32 %v549, 4294901760
        %1591 = vmatpush.msra.mxu0 %v1590
        %v1592 = vand.u32 %v545, 4294901760
        %1593 = vmatpush.msra.mxu0 %v1592
        %v1594 = vand.u32 %v541, 4294901760
        %1595 = vmatpush.msra.mxu0 %v1594
        %v1596 = vand.u32 %v580, 4294901760
        %v1597 = vsub.f32 %v580, %v1596
        %v1598 = vand.u32 %v1597, 4294901760
        %1599 = vmatmul.f32.gmra.mxu0 %v1598
        %v1600 = vpop.f32.mrf.mxu0
        %v1601 = vadd.f32 %v1559, %v1600
        %v1602 = vand.u32 %v583, 4294901760
        %v1603 = vsub.f32 %v583, %v1602
        %v1604 = vand.u32 %v1603, 4294901760
        %1605 = vmatmul.f32.gmra.mxu0 %v1604
        %v1606 = vpop.f32.mrf.mxu0
        %v1607 = vadd.f32 %v1564, %v1606
        %v1608 = vand.u32 %v586, 4294901760
        %v1609 = vsub.f32 %v586, %v1608
        %v1610 = vand.u32 %v1609, 4294901760
        %1611 = vmatmul.f32.gmra.mxu0 %v1610
        %v1612 = vpop.f32.mrf.mxu0
        %v1613 = vadd.f32 %v1569, %v1612
        %v1614 = vand.u32 %v589, 4294901760
        %v1615 = vsub.f32 %v589, %v1614
        %v1616 = vand.u32 %v1615, 4294901760
        %1617 = vmatmul.f32.gmra.mxu0 %v1616
        %v1618 = vpop.f32.mrf.mxu0
        %v1619 = vadd.f32 %v1574, %v1618
        %1620 = vdwg.mxu0
        %1621 = vmatpush.msra.mxu0 0.0
        %1622 = vmatpush.msra.mxu0 0.0
        %1623 = vmatpush.msra.mxu0 0.0
        %1624 = vmatpush.msra.mxu0 0.0
        %1625 = vmatpush.msra.mxu0 0.0
        %1626 = vmatpush.msra.mxu0 0.0
        %1627 = vmatpush.msra.mxu0 0.0
        %1628 = vmatpush.msra.mxu0 0.0
        %1629 = vmatpush.msra.mxu0 0.0
        %1630 = vmatpush.msra.mxu0 0.0
        %1631 = vmatpush.msra.mxu0 0.0
        %1632 = vmatpush.msra.mxu0 0.0
        %v1633 = vand.u32 %v553, 4294901760
        %v1634 = vsub.f32 %v553, %v1633
        %v1635 = vand.u32 %v1634, 4294901760
        %1636 = vmatpush.msra.mxu0 %v1635
        %v1637 = vand.u32 %v549, 4294901760
        %v1638 = vsub.f32 %v549, %v1637
        %v1639 = vand.u32 %v1638, 4294901760
        %1640 = vmatpush.msra.mxu0 %v1639
        %v1641 = vand.u32 %v545, 4294901760
        %v1642 = vsub.f32 %v545, %v1641
        %v1643 = vand.u32 %v1642, 4294901760
        %1644 = vmatpush.msra.mxu0 %v1643
        %v1645 = vand.u32 %v541, 4294901760
        %v1646 = vsub.f32 %v541, %v1645
        %v1647 = vand.u32 %v1646, 4294901760
        %1648 = vmatpush.msra.mxu0 %v1647
        %v1649 = vand.u32 %v580, 4294901760
        %1650 = vmatmul.f32.gmra.mxu0 %v1649
        %v1651 = vpop.f32.mrf.mxu0
        %v1652 = vadd.f32 %v1601, %v1651
        %v1653 = vand.u32 %v583, 4294901760
        %1654 = vmatmul.f32.gmra.mxu0 %v1653
        %v1655 = vpop.f32.mrf.mxu0
        %v1656 = vadd.f32 %v1607, %v1655
        %v1657 = vand.u32 %v586, 4294901760
        %1658 = vmatmul.f32.gmra.mxu0 %v1657
        %v1659 = vpop.f32.mrf.mxu0
        %v1660 = vadd.f32 %v1613, %v1659
        %v1661 = vand.u32 %v589, 4294901760
        %1662 = vmatmul.f32.gmra.mxu0 %v1661
        %v1663 = vpop.f32.mrf.mxu0
        %v1664 = vadd.f32 %v1619, %v1663
        %1665 = vdwg.mxu0
        %1666 = vmatpush.msra.mxu0 0.0
        %1667 = vmatpush.msra.mxu0 0.0
        %1668 = vmatpush.msra.mxu0 0.0
        %1669 = vmatpush.msra.mxu0 0.0
        %1670 = vmatpush.msra.mxu0 0.0
        %1671 = vmatpush.msra.mxu0 0.0
        %1672 = vmatpush.msra.mxu0 0.0
        %1673 = vmatpush.msra.mxu0 0.0
        %1674 = vmatpush.msra.mxu0 0.0
        %1675 = vmatpush.msra.mxu0 0.0
        %1676 = vmatpush.msra.mxu0 0.0
        %1677 = vmatpush.msra.mxu0 0.0
        %v1678 = vand.u32 %v553, 4294901760
        %1679 = vmatpush.msra.mxu0 %v1678
        %v1680 = vand.u32 %v549, 4294901760
        %1681 = vmatpush.msra.mxu0 %v1680
        %v1682 = vand.u32 %v545, 4294901760
        %1683 = vmatpush.msra.mxu0 %v1682
        %v1684 = vand.u32 %v541, 4294901760
        %1685 = vmatpush.msra.mxu0 %v1684
        %v1686 = vand.u32 %v580, 4294901760
        %1687 = vmatmul.f32.gmra.mxu0 %v1686
        %v1688 = vpop.f32.mrf.mxu0
        %v1689 = vadd.f32 %v1652, %v1688
        %v1690 = vand.u32 %v583, 4294901760
        %1691 = vmatmul.f32.gmra.mxu0 %v1690
        %v1692 = vpop.f32.mrf.mxu0
        %v1693 = vadd.f32 %v1656, %v1692
        %v1694 = vand.u32 %v586, 4294901760
        %1695 = vmatmul.f32.gmra.mxu0 %v1694
        %v1696 = vpop.f32.mrf.mxu0
        %v1697 = vadd.f32 %v1660, %v1696
        %v1698 = vand.u32 %v589, 4294901760
        %1699 = vmatmul.f32.gmra.mxu0 %v1698
        %v1700 = vpop.f32.mrf.mxu0
        %v1701 = vadd.f32 %v1664, %v1700
        %1702 = vdwg.mxu0
        %v1703 = vtanh.pop %v855
        %v1704 = vtanh.pop %v1133
        %v1705 = vtanh.pop %v1411
        %v1706 = vtanh.pop %v1689
        %v1707 = vtanh.pop %v859
        %v1708 = vtanh.pop %v1137
        %v1709 = vtanh.pop %v1415
        %v1710 = vtanh.pop %v1693
        %v1711 = vtanh.pop %v863
        %v1712 = vtanh.pop %v1141
        %v1713 = vtanh.pop %v1419
        %v1714 = vtanh.pop %v1697
        %v1715 = vtanh.pop %v867
        %v1716 = vtanh.pop %v1145
        %v1717 = vtanh.pop %v1423
        %v1718 = vtanh.pop %v1701
        %v1719 = vld [vmem:[%s6] sm:$0xff]
        %v1720 = vld [vmem:[%s6 + $0x8] sm:$0xff]
        %v1721 = vld [vmem:[%s6 + $0x10] sm:$0xff]
        %v1722 = vld [vmem:[%s6 + $0x18] sm:$0xff]
        %1724 = vset.pattern.permute.xlu0 0
        %1725 = vperm.xlu0 %1724, %v380
        %v1726 = vpop.permute.xlu0 %1725
        %1729 = vset.pattern.permute.xlu0 0
        %1730 = vperm.xlu0 %1729, %v381
        %v1731 = vpop.permute.xlu0 %1730
        %1734 = vset.pattern.permute.xlu0 0
        %1735 = vperm.xlu0 %1734, %v382
        %v1736 = vpop.permute.xlu0 %1735
        %1739 = vset.pattern.permute.xlu0 0
        %1740 = vperm.xlu0 %1739, %v383
        %v1741 = vpop.permute.xlu0 %1740
        %v1744 = vsel %vm578, %v1719, 0
        %v1747 = vsel %vm578, %v1720, 0
        %v1750 = vsel %vm578, %v1721, 0
        %v1753 = vsel %vm578, %v1722, 0
        %1755 = vmatpush.msra.mxu0 0.0
        %1756 = vmatpush.msra.mxu0 0.0
        %1757 = vmatpush.msra.mxu0 0.0
        %1758 = vmatpush.msra.mxu0 0.0
        %1759 = vmatpush.msra.mxu0 0.0
        %1760 = vmatpush.msra.mxu0 0.0
        %1761 = vmatpush.msra.mxu0 0.0
        %1762 = vmatpush.msra.mxu0 0.0
        %1763 = vmatpush.msra.mxu0 0.0
        %1764 = vmatpush.msra.mxu0 0.0
        %1765 = vmatpush.msra.mxu0 0.0
        %1766 = vmatpush.msra.mxu0 0.0
        %v1767 = vand.u32 %v1715, 4294901760
        %1768 = vmatpush.msra.mxu0 %v1767
        %v1769 = vand.u32 %v1711, 4294901760
        %1770 = vmatpush.msra.mxu0 %v1769
        %v1771 = vand.u32 %v1707, 4294901760
        %1772 = vmatpush.msra.mxu0 %v1771
        %v1773 = vand.u32 %v1703, 4294901760
        %1774 = vmatpush.msra.mxu0 %v1773
        %v1775 = vand.u32 %v1744, 4294901760
        %v1776 = vsub.f32 %v1744, %v1775
        %v1777 = vand.u32 %v1776, 4294901760
        %v1778 = vsub.f32 %v1776, %v1777
        %v1779 = vand.u32 %v1778, 4294901760
        %1780 = vmatmul.f32.gmra.mxu0 %v1779
        %v1781 = vpop.f32.mrf.mxu0
        %v1782 = vadd.f32 %v1726, %v1781
        %v1783 = vand.u32 %v1747, 4294901760
        %v1784 = vsub.f32 %v1747, %v1783
        %v1785 = vand.u32 %v1784, 4294901760
        %v1786 = vsub.f32 %v1784, %v1785
        %v1787 = vand.u32 %v1786, 4294901760
        %1788 = vmatmul.f32.gmra.mxu0 %v1787
        %v1789 = vpop.f32.mrf.mxu0
        %v1790 = vadd.f32 %v1731, %v1789
        %v1791 = vand.u32 %v1750, 4294901760
        %v1792 = vsub.f32 %v1750, %v1791
        %v1793 = vand.u32 %v1792, 4294901760
        %v1794 = vsub.f32 %v1792, %v1793
        %v1795 = vand.u32 %v1794, 4294901760
        %1796 = vmatmul.f32.gmra.mxu0 %v1795
        %v1797 = vpop.f32.mrf.mxu0
        %v1798 = vadd.f32 %v1736, %v1797
        %v1799 = vand.u32 %v1753, 4294901760
        %v1800 = vsub.f32 %v1753, %v1799
        %v1801 = vand.u32 %v1800, 4294901760
        %v1802 = vsub.f32 %v1800, %v1801
        %v1803 = vand.u32 %v1802, 4294901760
        %1804 = vmatmul.f32.gmra.mxu0 %v1803
        %v1805 = vpop.f32.mrf.mxu0
        %v1806 = vadd.f32 %v1741, %v1805
        %1807 = vdwg.mxu0
        %1808 = vmatpush.msra.mxu0 0.0
        %1809 = vmatpush.msra.mxu0 0.0
        %1810 = vmatpush.msra.mxu0 0.0
        %1811 = vmatpush.msra.mxu0 0.0
        %1812 = vmatpush.msra.mxu0 0.0
        %1813 = vmatpush.msra.mxu0 0.0
        %1814 = vmatpush.msra.mxu0 0.0
        %1815 = vmatpush.msra.mxu0 0.0
        %1816 = vmatpush.msra.mxu0 0.0
        %1817 = vmatpush.msra.mxu0 0.0
        %1818 = vmatpush.msra.mxu0 0.0
        %1819 = vmatpush.msra.mxu0 0.0
        %v1820 = vand.u32 %v1715, 4294901760
        %v1821 = vsub.f32 %v1715, %v1820
        %v1822 = vand.u32 %v1821, 4294901760
        %v1823 = vsub.f32 %v1821, %v1822
        %v1824 = vand.u32 %v1823, 4294901760
        %1825 = vmatpush.msra.mxu0 %v1824
        %v1826 = vand.u32 %v1711, 4294901760
        %v1827 = vsub.f32 %v1711, %v1826
        %v1828 = vand.u32 %v1827, 4294901760
        %v1829 = vsub.f32 %v1827, %v1828
        %v1830 = vand.u32 %v1829, 4294901760
        %1831 = vmatpush.msra.mxu0 %v1830
        %v1832 = vand.u32 %v1707, 4294901760
        %v1833 = vsub.f32 %v1707, %v1832
        %v1834 = vand.u32 %v1833, 4294901760
        %v1835 = vsub.f32 %v1833, %v1834
        %v1836 = vand.u32 %v1835, 4294901760
        %1837 = vmatpush.msra.mxu0 %v1836
        %v1838 = vand.u32 %v1703, 4294901760
        %v1839 = vsub.f32 %v1703, %v1838
        %v1840 = vand.u32 %v1839, 4294901760
        %v1841 = vsub.f32 %v1839, %v1840
        %v1842 = vand.u32 %v1841, 4294901760
        %1843 = vmatpush.msra.mxu0 %v1842
        %v1844 = vand.u32 %v1744, 4294901760
        %1845 = vmatmul.f32.gmra.mxu0 %v1844
        %v1846 = vpop.f32.mrf.mxu0
        %v1847 = vadd.f32 %v1782, %v1846
        %v1848 = vand.u32 %v1747, 4294901760
        %1849 = vmatmul.f32.gmra.mxu0 %v1848
        %v1850 = vpop.f32.mrf.mxu0
        %v1851 = vadd.f32 %v1790, %v1850
        %v1852 = vand.u32 %v1750, 4294901760
        %1853 = vmatmul.f32.gmra.mxu0 %v1852
        %v1854 = vpop.f32.mrf.mxu0
        %v1855 = vadd.f32 %v1798, %v1854
        %v1856 = vand.u32 %v1753, 4294901760
        %1857 = vmatmul.f32.gmra.mxu0 %v1856
        %v1858 = vpop.f32.mrf.mxu0
        %v1859 = vadd.f32 %v1806, %v1858
        %1860 = vdwg.mxu0
        %1861 = vmatpush.msra.mxu0 0.0
        %1862 = vmatpush.msra.mxu0 0.0
        %1863 = vmatpush.msra.mxu0 0.0
        %1864 = vmatpush.msra.mxu0 0.0
        %1865 = vmatpush.msra.mxu0 0.0
        %1866 = vmatpush.msra.mxu0 0.0
        %1867 = vmatpush.msra.mxu0 0.0
        %1868 = vmatpush.msra.mxu0 0.0
        %1869 = vmatpush.msra.mxu0 0.0
        %1870 = vmatpush.msra.mxu0 0.0
        %1871 = vmatpush.msra.mxu0 0.0
        %1872 = vmatpush.msra.mxu0 0.0
        %v1873 = vand.u32 %v1715, 4294901760
        %v1874 = vsub.f32 %v1715, %v1873
        %1875 = vmatpush.msra.mxu0 %v1874
        %v1876 = vand.u32 %v1711, 4294901760
        %v1877 = vsub.f32 %v1711, %v1876
        %1878 = vmatpush.msra.mxu0 %v1877
        %v1879 = vand.u32 %v1707, 4294901760
        %v1880 = vsub.f32 %v1707, %v1879
        %1881 = vmatpush.msra.mxu0 %v1880
        %v1882 = vand.u32 %v1703, 4294901760
        %v1883 = vsub.f32 %v1703, %v1882
        %1884 = vmatpush.msra.mxu0 %v1883
        %v1885 = vand.u32 %v1744, 4294901760
        %v1886 = vsub.f32 %v1744, %v1885
        %1887 = vmatmul.f32.gmra.mxu0 %v1886
        %v1888 = vpop.f32.mrf.mxu0
        %v1889 = vadd.f32 %v1847, %v1888
        %v1890 = vand.u32 %v1747, 4294901760
        %v1891 = vsub.f32 %v1747, %v1890
        %1892 = vmatmul.f32.gmra.mxu0 %v1891
        %v1893 = vpop.f32.mrf.mxu0
        %v1894 = vadd.f32 %v1851, %v1893
        %v1895 = vand.u32 %v1750, 4294901760
        %v1896 = vsub.f32 %v1750, %v1895
        %1897 = vmatmul.f32.gmra.mxu0 %v1896
        %v1898 = vpop.f32.mrf.mxu0
        %v1899 = vadd.f32 %v1855, %v1898
        %v1900 = vand.u32 %v1753, 4294901760
        %v1901 = vsub.f32 %v1753, %v1900
        %1902 = vmatmul.f32.gmra.mxu0 %v1901
        %v1903 = vpop.f32.mrf.mxu0
        %v1904 = vadd.f32 %v1859, %v1903
        %1905 = vdwg.mxu0
        %1906 = vmatpush.msra.mxu0 0.0
        %1907 = vmatpush.msra.mxu0 0.0
        %1908 = vmatpush.msra.mxu0 0.0
        %1909 = vmatpush.msra.mxu0 0.0
        %1910 = vmatpush.msra.mxu0 0.0
        %1911 = vmatpush.msra.mxu0 0.0
        %1912 = vmatpush.msra.mxu0 0.0
        %1913 = vmatpush.msra.mxu0 0.0
        %1914 = vmatpush.msra.mxu0 0.0
        %1915 = vmatpush.msra.mxu0 0.0
        %1916 = vmatpush.msra.mxu0 0.0
        %1917 = vmatpush.msra.mxu0 0.0
        %v1918 = vand.u32 %v1715, 4294901760
        %1919 = vmatpush.msra.mxu0 %v1918
        %v1920 = vand.u32 %v1711, 4294901760
        %1921 = vmatpush.msra.mxu0 %v1920
        %v1922 = vand.u32 %v1707, 4294901760
        %1923 = vmatpush.msra.mxu0 %v1922
        %v1924 = vand.u32 %v1703, 4294901760
        %1925 = vmatpush.msra.mxu0 %v1924
        %v1926 = vand.u32 %v1744, 4294901760
        %v1927 = vsub.f32 %v1744, %v1926
        %v1928 = vand.u32 %v1927, 4294901760
        %1929 = vmatmul.f32.gmra.mxu0 %v1928
        %v1930 = vpop.f32.mrf.mxu0
        %v1931 = vadd.f32 %v1889, %v1930
        %v1932 = vand.u32 %v1747, 4294901760
        %v1933 = vsub.f32 %v1747, %v1932
        %v1934 = vand.u32 %v1933, 4294901760
        %1935 = vmatmul.f32.gmra.mxu0 %v1934
        %v1936 = vpop.f32.mrf.mxu0
        %v1937 = vadd.f32 %v1894, %v1936
        %v1938 = vand.u32 %v1750, 4294901760
        %v1939 = vsub.f32 %v1750, %v1938
        %v1940 = vand.u32 %v1939, 4294901760
        %1941 = vmatmul.f32.gmra.mxu0 %v1940
        %v1942 = vpop.f32.mrf.mxu0
        %v1943 = vadd.f32 %v1899, %v1942
        %v1944 = vand.u32 %v1753, 4294901760
        %v1945 = vsub.f32 %v1753, %v1944
        %v1946 = vand.u32 %v1945, 4294901760
        %1947 = vmatmul.f32.gmra.mxu0 %v1946
        %v1948 = vpop.f32.mrf.mxu0
        %v1949 = vadd.f32 %v1904, %v1948
        %1950 = vdwg.mxu0
        %1951 = vmatpush.msra.mxu0 0.0
        %1952 = vmatpush.msra.mxu0 0.0
        %1953 = vmatpush.msra.mxu0 0.0
        %1954 = vmatpush.msra.mxu0 0.0
        %1955 = vmatpush.msra.mxu0 0.0
        %1956 = vmatpush.msra.mxu0 0.0
        %1957 = vmatpush.msra.mxu0 0.0
        %1958 = vmatpush.msra.mxu0 0.0
        %1959 = vmatpush.msra.mxu0 0.0
        %1960 = vmatpush.msra.mxu0 0.0
        %1961 = vmatpush.msra.mxu0 0.0
        %1962 = vmatpush.msra.mxu0 0.0
        %v1963 = vand.u32 %v1715, 4294901760
        %v1964 = vsub.f32 %v1715, %v1963
        %v1965 = vand.u32 %v1964, 4294901760
        %1966 = vmatpush.msra.mxu0 %v1965
        %v1967 = vand.u32 %v1711, 4294901760
        %v1968 = vsub.f32 %v1711, %v1967
        %v1969 = vand.u32 %v1968, 4294901760
        %1970 = vmatpush.msra.mxu0 %v1969
        %v1971 = vand.u32 %v1707, 4294901760
        %v1972 = vsub.f32 %v1707, %v1971
        %v1973 = vand.u32 %v1972, 4294901760
        %1974 = vmatpush.msra.mxu0 %v1973
        %v1975 = vand.u32 %v1703, 4294901760
        %v1976 = vsub.f32 %v1703, %v1975
        %v1977 = vand.u32 %v1976, 4294901760
        %1978 = vmatpush.msra.mxu0 %v1977
        %v1979 = vand.u32 %v1744, 4294901760
        %1980 = vmatmul.f32.gmra.mxu0 %v1979
        %v1981 = vpop.f32.mrf.mxu0
        %v1982 = vadd.f32 %v1931, %v1981
        %v1983 = vand.u32 %v1747, 4294901760
        %1984 = vmatmul.f32.gmra.mxu0 %v1983
        %v1985 = vpop.f32.mrf.mxu0
        %v1986 = vadd.f32 %v1937, %v1985
        %v1987 = vand.u32 %v1750, 4294901760
        %1988 = vmatmul.f32.gmra.mxu0 %v1987
        %v1989 = vpop.f32.mrf.mxu0
        %v1990 = vadd.f32 %v1943, %v1989
        %v1991 = vand.u32 %v1753, 4294901760
        %1992 = vmatmul.f32.gmra.mxu0 %v1991
        %v1993 = vpop.f32.mrf.mxu0
        %v1994 = vadd.f32 %v1949, %v1993
        %1995 = vdwg.mxu0
        %1996 = vmatpush.msra.mxu0 0.0
        %1997 = vmatpush.msra.mxu0 0.0
        %1998 = vmatpush.msra.mxu0 0.0
        %1999 = vmatpush.msra.mxu0 0.0
        %2000 = vmatpush.msra.mxu0 0.0
        %2001 = vmatpush.msra.mxu0 0.0
        %2002 = vmatpush.msra.mxu0 0.0
        %2003 = vmatpush.msra.mxu0 0.0
        %2004 = vmatpush.msra.mxu0 0.0
        %2005 = vmatpush.msra.mxu0 0.0
        %2006 = vmatpush.msra.mxu0 0.0
        %2007 = vmatpush.msra.mxu0 0.0
        %v2008 = vand.u32 %v1715, 4294901760
        %2009 = vmatpush.msra.mxu0 %v2008
        %v2010 = vand.u32 %v1711, 4294901760
        %2011 = vmatpush.msra.mxu0 %v2010
        %v2012 = vand.u32 %v1707, 4294901760
        %2013 = vmatpush.msra.mxu0 %v2012
        %v2014 = vand.u32 %v1703, 4294901760
        %2015 = vmatpush.msra.mxu0 %v2014
        %v2016 = vand.u32 %v1744, 4294901760
        %2017 = vmatmul.f32.gmra.mxu0 %v2016
        %v2018 = vpop.f32.mrf.mxu0
        %v2019 = vadd.f32 %v1982, %v2018
        %v2020 = vand.u32 %v1747, 4294901760
        %2021 = vmatmul.f32.gmra.mxu0 %v2020
        %v2022 = vpop.f32.mrf.mxu0
        %v2023 = vadd.f32 %v1986, %v2022
        %v2024 = vand.u32 %v1750, 4294901760
        %2025 = vmatmul.f32.gmra.mxu0 %v2024
        %v2026 = vpop.f32.mrf.mxu0
        %v2027 = vadd.f32 %v1990, %v2026
        %v2028 = vand.u32 %v1753, 4294901760
        %2029 = vmatmul.f32.gmra.mxu0 %v2028
        %v2030 = vpop.f32.mrf.mxu0
        %v2031 = vadd.f32 %v1994, %v2030
        %2032 = vdwg.mxu0
        %2033 = vmatpush.msra.mxu0 0.0
        %2034 = vmatpush.msra.mxu0 0.0
        %2035 = vmatpush.msra.mxu0 0.0
        %2036 = vmatpush.msra.mxu0 0.0
        %2037 = vmatpush.msra.mxu0 0.0
        %2038 = vmatpush.msra.mxu0 0.0
        %2039 = vmatpush.msra.mxu0 0.0
        %2040 = vmatpush.msra.mxu0 0.0
        %2041 = vmatpush.msra.mxu0 0.0
        %2042 = vmatpush.msra.mxu0 0.0
        %2043 = vmatpush.msra.mxu0 0.0
        %2044 = vmatpush.msra.mxu0 0.0
        %v2045 = vand.u32 %v1716, 4294901760
        %2046 = vmatpush.msra.mxu0 %v2045
        %v2047 = vand.u32 %v1712, 4294901760
        %2048 = vmatpush.msra.mxu0 %v2047
        %v2049 = vand.u32 %v1708, 4294901760
        %2050 = vmatpush.msra.mxu0 %v2049
        %v2051 = vand.u32 %v1704, 4294901760
        %2052 = vmatpush.msra.mxu0 %v2051
        %v2053 = vand.u32 %v1744, 4294901760
        %v2054 = vsub.f32 %v1744, %v2053
        %v2055 = vand.u32 %v2054, 4294901760
        %v2056 = vsub.f32 %v2054, %v2055
        %v2057 = vand.u32 %v2056, 4294901760
        %2058 = vmatmul.f32.gmra.mxu0 %v2057
        %v2059 = vpop.f32.mrf.mxu0
        %v2060 = vadd.f32 %v1726, %v2059
        %v2061 = vand.u32 %v1747, 4294901760
        %v2062 = vsub.f32 %v1747, %v2061
        %v2063 = vand.u32 %v2062, 4294901760
        %v2064 = vsub.f32 %v2062, %v2063
        %v2065 = vand.u32 %v2064, 4294901760
        %2066 = vmatmul.f32.gmra.mxu0 %v2065
        %v2067 = vpop.f32.mrf.mxu0
        %v2068 = vadd.f32 %v1731, %v2067
        %v2069 = vand.u32 %v1750, 4294901760
        %v2070 = vsub.f32 %v1750, %v2069
        %v2071 = vand.u32 %v2070, 4294901760
        %v2072 = vsub.f32 %v2070, %v2071
        %v2073 = vand.u32 %v2072, 4294901760
        %2074 = vmatmul.f32.gmra.mxu0 %v2073
        %v2075 = vpop.f32.mrf.mxu0
        %v2076 = vadd.f32 %v1736, %v2075
        %v2077 = vand.u32 %v1753, 4294901760
        %v2078 = vsub.f32 %v1753, %v2077
        %v2079 = vand.u32 %v2078, 4294901760
        %v2080 = vsub.f32 %v2078, %v2079
        %v2081 = vand.u32 %v2080, 4294901760
        %2082 = vmatmul.f32.gmra.mxu0 %v2081
        %v2083 = vpop.f32.mrf.mxu0
        %v2084 = vadd.f32 %v1741, %v2083
        %2085 = vdwg.mxu0
        %2086 = vmatpush.msra.mxu0 0.0
        %2087 = vmatpush.msra.mxu0 0.0
        %2088 = vmatpush.msra.mxu0 0.0
        %2089 = vmatpush.msra.mxu0 0.0
        %2090 = vmatpush.msra.mxu0 0.0
        %2091 = vmatpush.msra.mxu0 0.0
        %2092 = vmatpush.msra.mxu0 0.0
        %2093 = vmatpush.msra.mxu0 0.0
        %2094 = vmatpush.msra.mxu0 0.0
        %2095 = vmatpush.msra.mxu0 0.0
        %2096 = vmatpush.msra.mxu0 0.0
        %2097 = vmatpush.msra.mxu0 0.0
        %v2098 = vand.u32 %v1716, 4294901760
        %v2099 = vsub.f32 %v1716, %v2098
        %v2100 = vand.u32 %v2099, 4294901760
        %v2101 = vsub.f32 %v2099, %v2100
        %v2102 = vand.u32 %v2101, 4294901760
        %2103 = vmatpush.msra.mxu0 %v2102
        %v2104 = vand.u32 %v1712, 4294901760
        %v2105 = vsub.f32 %v1712, %v2104
        %v2106 = vand.u32 %v2105, 4294901760
        %v2107 = vsub.f32 %v2105, %v2106
        %v2108 = vand.u32 %v2107, 4294901760
        %2109 = vmatpush.msra.mxu0 %v2108
        %v2110 = vand.u32 %v1708, 4294901760
        %v2111 = vsub.f32 %v1708, %v2110
        %v2112 = vand.u32 %v2111, 4294901760
        %v2113 = vsub.f32 %v2111, %v2112
        %v2114 = vand.u32 %v2113, 4294901760
        %2115 = vmatpush.msra.mxu0 %v2114
        %v2116 = vand.u32 %v1704, 4294901760
        %v2117 = vsub.f32 %v1704, %v2116
        %v2118 = vand.u32 %v2117, 4294901760
        %v2119 = vsub.f32 %v2117, %v2118
        %v2120 = vand.u32 %v2119, 4294901760
        %2121 = vmatpush.msra.mxu0 %v2120
        %v2122 = vand.u32 %v1744, 4294901760
        %2123 = vmatmul.f32.gmra.mxu0 %v2122
        %v2124 = vpop.f32.mrf.mxu0
        %v2125 = vadd.f32 %v2060, %v2124
        %v2126 = vand.u32 %v1747, 4294901760
        %2127 = vmatmul.f32.gmra.mxu0 %v2126
        %v2128 = vpop.f32.mrf.mxu0
        %v2129 = vadd.f32 %v2068, %v2128
        %v2130 = vand.u32 %v1750, 4294901760
        %2131 = vmatmul.f32.gmra.mxu0 %v2130
        %v2132 = vpop.f32.mrf.mxu0
        %v2133 = vadd.f32 %v2076, %v2132
        %v2134 = vand.u32 %v1753, 4294901760
        %2135 = vmatmul.f32.gmra.mxu0 %v2134
        %v2136 = vpop.f32.mrf.mxu0
        %v2137 = vadd.f32 %v2084, %v2136
        %2138 = vdwg.mxu0
        %2139 = vmatpush.msra.mxu0 0.0
        %2140 = vmatpush.msra.mxu0 0.0
        %2141 = vmatpush.msra.mxu0 0.0
        %2142 = vmatpush.msra.mxu0 0.0
        %2143 = vmatpush.msra.mxu0 0.0
        %2144 = vmatpush.msra.mxu0 0.0
        %2145 = vmatpush.msra.mxu0 0.0
        %2146 = vmatpush.msra.mxu0 0.0
        %2147 = vmatpush.msra.mxu0 0.0
        %2148 = vmatpush.msra.mxu0 0.0
        %2149 = vmatpush.msra.mxu0 0.0
        %2150 = vmatpush.msra.mxu0 0.0
        %v2151 = vand.u32 %v1716, 4294901760
        %v2152 = vsub.f32 %v1716, %v2151
        %2153 = vmatpush.msra.mxu0 %v2152
        %v2154 = vand.u32 %v1712, 4294901760
        %v2155 = vsub.f32 %v1712, %v2154
        %2156 = vmatpush.msra.mxu0 %v2155
        %v2157 = vand.u32 %v1708, 4294901760
        %v2158 = vsub.f32 %v1708, %v2157
        %2159 = vmatpush.msra.mxu0 %v2158
        %v2160 = vand.u32 %v1704, 4294901760
        %v2161 = vsub.f32 %v1704, %v2160
        %2162 = vmatpush.msra.mxu0 %v2161
        %v2163 = vand.u32 %v1744, 4294901760
        %v2164 = vsub.f32 %v1744, %v2163
        %2165 = vmatmul.f32.gmra.mxu0 %v2164
        %v2166 = vpop.f32.mrf.mxu0
        %v2167 = vadd.f32 %v2125, %v2166
        %v2168 = vand.u32 %v1747, 4294901760
        %v2169 = vsub.f32 %v1747, %v2168
        %2170 = vmatmul.f32.gmra.mxu0 %v2169
        %v2171 = vpop.f32.mrf.mxu0
        %v2172 = vadd.f32 %v2129, %v2171
        %v2173 = vand.u32 %v1750, 4294901760
        %v2174 = vsub.f32 %v1750, %v2173
        %2175 = vmatmul.f32.gmra.mxu0 %v2174
        %v2176 = vpop.f32.mrf.mxu0
        %v2177 = vadd.f32 %v2133, %v2176
        %v2178 = vand.u32 %v1753, 4294901760
        %v2179 = vsub.f32 %v1753, %v2178
        %2180 = vmatmul.f32.gmra.mxu0 %v2179
        %v2181 = vpop.f32.mrf.mxu0
        %v2182 = vadd.f32 %v2137, %v2181
        %2183 = vdwg.mxu0
        %2184 = vmatpush.msra.mxu0 0.0
        %2185 = vmatpush.msra.mxu0 0.0
        %2186 = vmatpush.msra.mxu0 0.0
        %2187 = vmatpush.msra.mxu0 0.0
        %2188 = vmatpush.msra.mxu0 0.0
        %2189 = vmatpush.msra.mxu0 0.0
        %2190 = vmatpush.msra.mxu0 0.0
        %2191 = vmatpush.msra.mxu0 0.0
        %2192 = vmatpush.msra.mxu0 0.0
        %2193 = vmatpush.msra.mxu0 0.0
        %2194 = vmatpush.msra.mxu0 0.0
        %2195 = vmatpush.msra.mxu0 0.0
        %v2196 = vand.u32 %v1716, 4294901760
        %2197 = vmatpush.msra.mxu0 %v2196
        %v2198 = vand.u32 %v1712, 4294901760
        %2199 = vmatpush.msra.mxu0 %v2198
        %v2200 = vand.u32 %v1708, 4294901760
        %2201 = vmatpush.msra.mxu0 %v2200
        %v2202 = vand.u32 %v1704, 4294901760
        %2203 = vmatpush.msra.mxu0 %v2202
        %v2204 = vand.u32 %v1744, 4294901760
        %v2205 = vsub.f32 %v1744, %v2204
        %v2206 = vand.u32 %v2205, 4294901760
        %2207 = vmatmul.f32.gmra.mxu0 %v2206
        %v2208 = vpop.f32.mrf.mxu0
        %v2209 = vadd.f32 %v2167, %v2208
        %v2210 = vand.u32 %v1747, 4294901760
        %v2211 = vsub.f32 %v1747, %v2210
        %v2212 = vand.u32 %v2211, 4294901760
        %2213 = vmatmul.f32.gmra.mxu0 %v2212
        %v2214 = vpop.f32.mrf.mxu0
        %v2215 = vadd.f32 %v2172, %v2214
        %v2216 = vand.u32 %v1750, 4294901760
        %v2217 = vsub.f32 %v1750, %v2216
        %v2218 = vand.u32 %v2217, 4294901760
        %2219 = vmatmul.f32.gmra.mxu0 %v2218
        %v2220 = vpop.f32.mrf.mxu0
        %v2221 = vadd.f32 %v2177, %v2220
        %v2222 = vand.u32 %v1753, 4294901760
        %v2223 = vsub.f32 %v1753, %v2222
        %v2224 = vand.u32 %v2223, 4294901760
        %2225 = vmatmul.f32.gmra.mxu0 %v2224
        %v2226 = vpop.f32.mrf.mxu0
        %v2227 = vadd.f32 %v2182, %v2226
        %2228 = vdwg.mxu0
        %2229 = vmatpush.msra.mxu0 0.0
        %2230 = vmatpush.msra.mxu0 0.0
        %2231 = vmatpush.msra.mxu0 0.0
        %2232 = vmatpush.msra.mxu0 0.0
        %2233 = vmatpush.msra.mxu0 0.0
        %2234 = vmatpush.msra.mxu0 0.0
        %2235 = vmatpush.msra.mxu0 0.0
        %2236 = vmatpush.msra.mxu0 0.0
        %2237 = vmatpush.msra.mxu0 0.0
        %2238 = vmatpush.msra.mxu0 0.0
        %2239 = vmatpush.msra.mxu0 0.0
        %2240 = vmatpush.msra.mxu0 0.0
        %v2241 = vand.u32 %v1716, 4294901760
        %v2242 = vsub.f32 %v1716, %v2241
        %v2243 = vand.u32 %v2242, 4294901760
        %2244 = vmatpush.msra.mxu0 %v2243
        %v2245 = vand.u32 %v1712, 4294901760
        %v2246 = vsub.f32 %v1712, %v2245
        %v2247 = vand.u32 %v2246, 4294901760
        %2248 = vmatpush.msra.mxu0 %v2247
        %v2249 = vand.u32 %v1708, 4294901760
        %v2250 = vsub.f32 %v1708, %v2249
        %v2251 = vand.u32 %v2250, 4294901760
        %2252 = vmatpush.msra.mxu0 %v2251
        %v2253 = vand.u32 %v1704, 4294901760
        %v2254 = vsub.f32 %v1704, %v2253
        %v2255 = vand.u32 %v2254, 4294901760
        %2256 = vmatpush.msra.mxu0 %v2255
        %v2257 = vand.u32 %v1744, 4294901760
        %2258 = vmatmul.f32.gmra.mxu0 %v2257
        %v2259 = vpop.f32.mrf.mxu0
        %v2260 = vadd.f32 %v2209, %v2259
        %v2261 = vand.u32 %v1747, 4294901760
        %2262 = vmatmul.f32.gmra.mxu0 %v2261
        %v2263 = vpop.f32.mrf.mxu0
        %v2264 = vadd.f32 %v2215, %v2263
        %v2265 = vand.u32 %v1750, 4294901760
        %2266 = vmatmul.f32.gmra.mxu0 %v2265
        %v2267 = vpop.f32.mrf.mxu0
        %v2268 = vadd.f32 %v2221, %v2267
        %v2269 = vand.u32 %v1753, 4294901760
        %2270 = vmatmul.f32.gmra.mxu0 %v2269
        %v2271 = vpop.f32.mrf.mxu0
        %v2272 = vadd.f32 %v2227, %v2271
        %2273 = vdwg.mxu0
        %2274 = vmatpush.msra.mxu0 0.0
        %2275 = vmatpush.msra.mxu0 0.0
        %2276 = vmatpush.msra.mxu0 0.0
        %2277 = vmatpush.msra.mxu0 0.0
        %2278 = vmatpush.msra.mxu0 0.0
        %2279 = vmatpush.msra.mxu0 0.0
        %2280 = vmatpush.msra.mxu0 0.0
        %2281 = vmatpush.msra.mxu0 0.0
        %2282 = vmatpush.msra.mxu0 0.0
        %2283 = vmatpush.msra.mxu0 0.0
        %2284 = vmatpush.msra.mxu0 0.0
        %2285 = vmatpush.msra.mxu0 0.0
        %v2286 = vand.u32 %v1716, 4294901760
        %2287 = vmatpush.msra.mxu0 %v2286
        %v2288 = vand.u32 %v1712, 4294901760
        %2289 = vmatpush.msra.mxu0 %v2288
        %v2290 = vand.u32 %v1708, 4294901760
        %2291 = vmatpush.msra.mxu0 %v2290
        %v2292 = vand.u32 %v1704, 4294901760
        %2293 = vmatpush.msra.mxu0 %v2292
        %v2294 = vand.u32 %v1744, 4294901760
        %2295 = vmatmul.f32.gmra.mxu0 %v2294
        %v2296 = vpop.f32.mrf.mxu0
        %v2297 = vadd.f32 %v2260, %v2296
        %v2298 = vand.u32 %v1747, 4294901760
        %2299 = vmatmul.f32.gmra.mxu0 %v2298
        %v2300 = vpop.f32.mrf.mxu0
        %v2301 = vadd.f32 %v2264, %v2300
        %v2302 = vand.u32 %v1750, 4294901760
        %2303 = vmatmul.f32.gmra.mxu0 %v2302
        %v2304 = vpop.f32.mrf.mxu0
        %v2305 = vadd.f32 %v2268, %v2304
        %v2306 = vand.u32 %v1753, 4294901760
        %2307 = vmatmul.f32.gmra.mxu0 %v2306
        %v2308 = vpop.f32.mrf.mxu0
        %v2309 = vadd.f32 %v2272, %v2308
        %2310 = vdwg.mxu0
        %2311 = vmatpush.msra.mxu0 0.0
        %2312 = vmatpush.msra.mxu0 0.0
        %2313 = vmatpush.msra.mxu0 0.0
        %2314 = vmatpush.msra.mxu0 0.0
        %2315 = vmatpush.msra.mxu0 0.0
        %2316 = vmatpush.msra.mxu0 0.0
        %2317 = vmatpush.msra.mxu0 0.0
        %2318 = vmatpush.msra.mxu0 0.0
        %2319 = vmatpush.msra.mxu0 0.0
        %2320 = vmatpush.msra.mxu0 0.0
        %2321 = vmatpush.msra.mxu0 0.0
        %2322 = vmatpush.msra.mxu0 0.0
        %v2323 = vand.u32 %v1717, 4294901760
        %2324 = vmatpush.msra.mxu0 %v2323
        %v2325 = vand.u32 %v1713, 4294901760
        %2326 = vmatpush.msra.mxu0 %v2325
        %v2327 = vand.u32 %v1709, 4294901760
        %2328 = vmatpush.msra.mxu0 %v2327
        %v2329 = vand.u32 %v1705, 4294901760
        %2330 = vmatpush.msra.mxu0 %v2329
        %v2331 = vand.u32 %v1744, 4294901760
        %v2332 = vsub.f32 %v1744, %v2331
        %v2333 = vand.u32 %v2332, 4294901760
        %v2334 = vsub.f32 %v2332, %v2333
        %v2335 = vand.u32 %v2334, 4294901760
        %2336 = vmatmul.f32.gmra.mxu0 %v2335
        %v2337 = vpop.f32.mrf.mxu0
        %v2338 = vadd.f32 %v1726, %v2337
        %v2339 = vand.u32 %v1747, 4294901760
        %v2340 = vsub.f32 %v1747, %v2339
        %v2341 = vand.u32 %v2340, 4294901760
        %v2342 = vsub.f32 %v2340, %v2341
        %v2343 = vand.u32 %v2342, 4294901760
        %2344 = vmatmul.f32.gmra.mxu0 %v2343
        %v2345 = vpop.f32.mrf.mxu0
        %v2346 = vadd.f32 %v1731, %v2345
        %v2347 = vand.u32 %v1750, 4294901760
        %v2348 = vsub.f32 %v1750, %v2347
        %v2349 = vand.u32 %v2348, 4294901760
        %v2350 = vsub.f32 %v2348, %v2349
        %v2351 = vand.u32 %v2350, 4294901760
        %2352 = vmatmul.f32.gmra.mxu0 %v2351
        %v2353 = vpop.f32.mrf.mxu0
        %v2354 = vadd.f32 %v1736, %v2353
        %v2355 = vand.u32 %v1753, 4294901760
        %v2356 = vsub.f32 %v1753, %v2355
        %v2357 = vand.u32 %v2356, 4294901760
        %v2358 = vsub.f32 %v2356, %v2357
        %v2359 = vand.u32 %v2358, 4294901760
        %2360 = vmatmul.f32.gmra.mxu0 %v2359
        %v2361 = vpop.f32.mrf.mxu0
        %v2362 = vadd.f32 %v1741, %v2361
        %2363 = vdwg.mxu0
        %2364 = vmatpush.msra.mxu0 0.0
        %2365 = vmatpush.msra.mxu0 0.0
        %2366 = vmatpush.msra.mxu0 0.0
        %2367 = vmatpush.msra.mxu0 0.0
        %2368 = vmatpush.msra.mxu0 0.0
        %2369 = vmatpush.msra.mxu0 0.0
        %2370 = vmatpush.msra.mxu0 0.0
        %2371 = vmatpush.msra.mxu0 0.0
        %2372 = vmatpush.msra.mxu0 0.0
        %2373 = vmatpush.msra.mxu0 0.0
        %2374 = vmatpush.msra.mxu0 0.0
        %2375 = vmatpush.msra.mxu0 0.0
        %v2376 = vand.u32 %v1717, 4294901760
        %v2377 = vsub.f32 %v1717, %v2376
        %v2378 = vand.u32 %v2377, 4294901760
        %v2379 = vsub.f32 %v2377, %v2378
        %v2380 = vand.u32 %v2379, 4294901760
        %2381 = vmatpush.msra.mxu0 %v2380
        %v2382 = vand.u32 %v1713, 4294901760
        %v2383 = vsub.f32 %v1713, %v2382
        %v2384 = vand.u32 %v2383, 4294901760
        %v2385 = vsub.f32 %v2383, %v2384
        %v2386 = vand.u32 %v2385, 4294901760
        %2387 = vmatpush.msra.mxu0 %v2386
        %v2388 = vand.u32 %v1709, 4294901760
        %v2389 = vsub.f32 %v1709, %v2388
        %v2390 = vand.u32 %v2389, 4294901760
        %v2391 = vsub.f32 %v2389, %v2390
        %v2392 = vand.u32 %v2391, 4294901760
        %2393 = vmatpush.msra.mxu0 %v2392
        %v2394 = vand.u32 %v1705, 4294901760
        %v2395 = vsub.f32 %v1705, %v2394
        %v2396 = vand.u32 %v2395, 4294901760
        %v2397 = vsub.f32 %v2395, %v2396
        %v2398 = vand.u32 %v2397, 4294901760
        %2399 = vmatpush.msra.mxu0 %v2398
        %v2400 = vand.u32 %v1744, 4294901760
        %2401 = vmatmul.f32.gmra.mxu0 %v2400
        %v2402 = vpop.f32.mrf.mxu0
        %v2403 = vadd.f32 %v2338, %v2402
        %v2404 = vand.u32 %v1747, 4294901760
        %2405 = vmatmul.f32.gmra.mxu0 %v2404
        %v2406 = vpop.f32.mrf.mxu0
        %v2407 = vadd.f32 %v2346, %v2406
        %v2408 = vand.u32 %v1750, 4294901760
        %2409 = vmatmul.f32.gmra.mxu0 %v2408
        %v2410 = vpop.f32.mrf.mxu0
        %v2411 = vadd.f32 %v2354, %v2410
        %v2412 = vand.u32 %v1753, 4294901760
        %2413 = vmatmul.f32.gmra.mxu0 %v2412
        %v2414 = vpop.f32.mrf.mxu0
        %v2415 = vadd.f32 %v2362, %v2414
        %2416 = vdwg.mxu0
        %2417 = vmatpush.msra.mxu0 0.0
        %2418 = vmatpush.msra.mxu0 0.0
        %2419 = vmatpush.msra.mxu0 0.0
        %2420 = vmatpush.msra.mxu0 0.0
        %2421 = vmatpush.msra.mxu0 0.0
        %2422 = vmatpush.msra.mxu0 0.0
        %2423 = vmatpush.msra.mxu0 0.0
        %2424 = vmatpush.msra.mxu0 0.0
        %2425 = vmatpush.msra.mxu0 0.0
        %2426 = vmatpush.msra.mxu0 0.0
        %2427 = vmatpush.msra.mxu0 0.0
        %2428 = vmatpush.msra.mxu0 0.0
        %v2429 = vand.u32 %v1717, 4294901760
        %v2430 = vsub.f32 %v1717, %v2429
        %2431 = vmatpush.msra.mxu0 %v2430
        %v2432 = vand.u32 %v1713, 4294901760
        %v2433 = vsub.f32 %v1713, %v2432
        %2434 = vmatpush.msra.mxu0 %v2433
        %v2435 = vand.u32 %v1709, 4294901760
        %v2436 = vsub.f32 %v1709, %v2435
        %2437 = vmatpush.msra.mxu0 %v2436
        %v2438 = vand.u32 %v1705, 4294901760
        %v2439 = vsub.f32 %v1705, %v2438
        %2440 = vmatpush.msra.mxu0 %v2439
        %v2441 = vand.u32 %v1744, 4294901760
        %v2442 = vsub.f32 %v1744, %v2441
        %2443 = vmatmul.f32.gmra.mxu0 %v2442
        %v2444 = vpop.f32.mrf.mxu0
        %v2445 = vadd.f32 %v2403, %v2444
        %v2446 = vand.u32 %v1747, 4294901760
        %v2447 = vsub.f32 %v1747, %v2446
        %2448 = vmatmul.f32.gmra.mxu0 %v2447
        %v2449 = vpop.f32.mrf.mxu0
        %v2450 = vadd.f32 %v2407, %v2449
        %v2451 = vand.u32 %v1750, 4294901760
        %v2452 = vsub.f32 %v1750, %v2451
        %2453 = vmatmul.f32.gmra.mxu0 %v2452
        %v2454 = vpop.f32.mrf.mxu0
        %v2455 = vadd.f32 %v2411, %v2454
        %v2456 = vand.u32 %v1753, 4294901760
        %v2457 = vsub.f32 %v1753, %v2456
        %2458 = vmatmul.f32.gmra.mxu0 %v2457
        %v2459 = vpop.f32.mrf.mxu0
        %v2460 = vadd.f32 %v2415, %v2459
        %2461 = vdwg.mxu0
        %2462 = vmatpush.msra.mxu0 0.0
        %2463 = vmatpush.msra.mxu0 0.0
        %2464 = vmatpush.msra.mxu0 0.0
        %2465 = vmatpush.msra.mxu0 0.0
        %2466 = vmatpush.msra.mxu0 0.0
        %2467 = vmatpush.msra.mxu0 0.0
        %2468 = vmatpush.msra.mxu0 0.0
        %2469 = vmatpush.msra.mxu0 0.0
        %2470 = vmatpush.msra.mxu0 0.0
        %2471 = vmatpush.msra.mxu0 0.0
        %2472 = vmatpush.msra.mxu0 0.0
        %2473 = vmatpush.msra.mxu0 0.0
        %v2474 = vand.u32 %v1717, 4294901760
        %2475 = vmatpush.msra.mxu0 %v2474
        %v2476 = vand.u32 %v1713, 4294901760
        %2477 = vmatpush.msra.mxu0 %v2476
        %v2478 = vand.u32 %v1709, 4294901760
        %2479 = vmatpush.msra.mxu0 %v2478
        %v2480 = vand.u32 %v1705, 4294901760
        %2481 = vmatpush.msra.mxu0 %v2480
        %v2482 = vand.u32 %v1744, 4294901760
        %v2483 = vsub.f32 %v1744, %v2482
        %v2484 = vand.u32 %v2483, 4294901760
        %2485 = vmatmul.f32.gmra.mxu0 %v2484
        %v2486 = vpop.f32.mrf.mxu0
        %v2487 = vadd.f32 %v2445, %v2486
        %v2488 = vand.u32 %v1747, 4294901760
        %v2489 = vsub.f32 %v1747, %v2488
        %v2490 = vand.u32 %v2489, 4294901760
        %2491 = vmatmul.f32.gmra.mxu0 %v2490
        %v2492 = vpop.f32.mrf.mxu0
        %v2493 = vadd.f32 %v2450, %v2492
        %v2494 = vand.u32 %v1750, 4294901760
        %v2495 = vsub.f32 %v1750, %v2494
        %v2496 = vand.u32 %v2495, 4294901760
        %2497 = vmatmul.f32.gmra.mxu0 %v2496
        %v2498 = vpop.f32.mrf.mxu0
        %v2499 = vadd.f32 %v2455, %v2498
        %v2500 = vand.u32 %v1753, 4294901760
        %v2501 = vsub.f32 %v1753, %v2500
        %v2502 = vand.u32 %v2501, 4294901760
        %2503 = vmatmul.f32.gmra.mxu0 %v2502
        %v2504 = vpop.f32.mrf.mxu0
        %v2505 = vadd.f32 %v2460, %v2504
        %2506 = vdwg.mxu0
        %2507 = vmatpush.msra.mxu0 0.0
        %2508 = vmatpush.msra.mxu0 0.0
        %2509 = vmatpush.msra.mxu0 0.0
        %2510 = vmatpush.msra.mxu0 0.0
        %2511 = vmatpush.msra.mxu0 0.0
        %2512 = vmatpush.msra.mxu0 0.0
        %2513 = vmatpush.msra.mxu0 0.0
        %2514 = vmatpush.msra.mxu0 0.0
        %2515 = vmatpush.msra.mxu0 0.0
        %2516 = vmatpush.msra.mxu0 0.0
        %2517 = vmatpush.msra.mxu0 0.0
        %2518 = vmatpush.msra.mxu0 0.0
        %v2519 = vand.u32 %v1717, 4294901760
        %v2520 = vsub.f32 %v1717, %v2519
        %v2521 = vand.u32 %v2520, 4294901760
        %2522 = vmatpush.msra.mxu0 %v2521
        %v2523 = vand.u32 %v1713, 4294901760
        %v2524 = vsub.f32 %v1713, %v2523
        %v2525 = vand.u32 %v2524, 4294901760
        %2526 = vmatpush.msra.mxu0 %v2525
        %v2527 = vand.u32 %v1709, 4294901760
        %v2528 = vsub.f32 %v1709, %v2527
        %v2529 = vand.u32 %v2528, 4294901760
        %2530 = vmatpush.msra.mxu0 %v2529
        %v2531 = vand.u32 %v1705, 4294901760
        %v2532 = vsub.f32 %v1705, %v2531
        %v2533 = vand.u32 %v2532, 4294901760
        %2534 = vmatpush.msra.mxu0 %v2533
        %v2535 = vand.u32 %v1744, 4294901760
        %2536 = vmatmul.f32.gmra.mxu0 %v2535
        %v2537 = vpop.f32.mrf.mxu0
        %v2538 = vadd.f32 %v2487, %v2537
        %v2539 = vand.u32 %v1747, 4294901760
        %2540 = vmatmul.f32.gmra.mxu0 %v2539
        %v2541 = vpop.f32.mrf.mxu0
        %v2542 = vadd.f32 %v2493, %v2541
        %v2543 = vand.u32 %v1750, 4294901760
        %2544 = vmatmul.f32.gmra.mxu0 %v2543
        %v2545 = vpop.f32.mrf.mxu0
        %v2546 = vadd.f32 %v2499, %v2545
        %v2547 = vand.u32 %v1753, 4294901760
        %2548 = vmatmul.f32.gmra.mxu0 %v2547
        %v2549 = vpop.f32.mrf.mxu0
        %v2550 = vadd.f32 %v2505, %v2549
        %2551 = vdwg.mxu0
        %2552 = vmatpush.msra.mxu0 0.0
        %2553 = vmatpush.msra.mxu0 0.0
        %2554 = vmatpush.msra.mxu0 0.0
        %2555 = vmatpush.msra.mxu0 0.0
        %2556 = vmatpush.msra.mxu0 0.0
        %2557 = vmatpush.msra.mxu0 0.0
        %2558 = vmatpush.msra.mxu0 0.0
        %2559 = vmatpush.msra.mxu0 0.0
        %2560 = vmatpush.msra.mxu0 0.0
        %2561 = vmatpush.msra.mxu0 0.0
        %2562 = vmatpush.msra.mxu0 0.0
        %2563 = vmatpush.msra.mxu0 0.0
        %v2564 = vand.u32 %v1717, 4294901760
        %2565 = vmatpush.msra.mxu0 %v2564
        %v2566 = vand.u32 %v1713, 4294901760
        %2567 = vmatpush.msra.mxu0 %v2566
        %v2568 = vand.u32 %v1709, 4294901760
        %2569 = vmatpush.msra.mxu0 %v2568
        %v2570 = vand.u32 %v1705, 4294901760
        %2571 = vmatpush.msra.mxu0 %v2570
        %v2572 = vand.u32 %v1744, 4294901760
        %2573 = vmatmul.f32.gmra.mxu0 %v2572
        %v2574 = vpop.f32.mrf.mxu0
        %v2575 = vadd.f32 %v2538, %v2574
        %v2576 = vand.u32 %v1747, 4294901760
        %2577 = vmatmul.f32.gmra.mxu0 %v2576
        %v2578 = vpop.f32.mrf.mxu0
        %v2579 = vadd.f32 %v2542, %v2578
        %v2580 = vand.u32 %v1750, 4294901760
        %2581 = vmatmul.f32.gmra.mxu0 %v2580
        %v2582 = vpop.f32.mrf.mxu0
        %v2583 = vadd.f32 %v2546, %v2582
        %v2584 = vand.u32 %v1753, 4294901760
        %2585 = vmatmul.f32.gmra.mxu0 %v2584
        %v2586 = vpop.f32.mrf.mxu0
        %v2587 = vadd.f32 %v2550, %v2586
        %2588 = vdwg.mxu0
        %2589 = vmatpush.msra.mxu0 0.0
        %2590 = vmatpush.msra.mxu0 0.0
        %2591 = vmatpush.msra.mxu0 0.0
        %2592 = vmatpush.msra.mxu0 0.0
        %2593 = vmatpush.msra.mxu0 0.0
        %2594 = vmatpush.msra.mxu0 0.0
        %2595 = vmatpush.msra.mxu0 0.0
        %2596 = vmatpush.msra.mxu0 0.0
        %2597 = vmatpush.msra.mxu0 0.0
        %2598 = vmatpush.msra.mxu0 0.0
        %2599 = vmatpush.msra.mxu0 0.0
        %2600 = vmatpush.msra.mxu0 0.0
        %v2601 = vand.u32 %v1718, 4294901760
        %2602 = vmatpush.msra.mxu0 %v2601
        %v2603 = vand.u32 %v1714, 4294901760
        %2604 = vmatpush.msra.mxu0 %v2603
        %v2605 = vand.u32 %v1710, 4294901760
        %2606 = vmatpush.msra.mxu0 %v2605
        %v2607 = vand.u32 %v1706, 4294901760
        %2608 = vmatpush.msra.mxu0 %v2607
        %v2609 = vand.u32 %v1744, 4294901760
        %v2610 = vsub.f32 %v1744, %v2609
        %v2611 = vand.u32 %v2610, 4294901760
        %v2612 = vsub.f32 %v2610, %v2611
        %v2613 = vand.u32 %v2612, 4294901760
        %2614 = vmatmul.f32.gmra.mxu0 %v2613
        %v2615 = vpop.f32.mrf.mxu0
        %v2616 = vadd.f32 %v1726, %v2615
        %v2617 = vand.u32 %v1747, 4294901760
        %v2618 = vsub.f32 %v1747, %v2617
        %v2619 = vand.u32 %v2618, 4294901760
        %v2620 = vsub.f32 %v2618, %v2619
        %v2621 = vand.u32 %v2620, 4294901760
        %2622 = vmatmul.f32.gmra.mxu0 %v2621
        %v2623 = vpop.f32.mrf.mxu0
        %v2624 = vadd.f32 %v1731, %v2623
        %v2625 = vand.u32 %v1750, 4294901760
        %v2626 = vsub.f32 %v1750, %v2625
        %v2627 = vand.u32 %v2626, 4294901760
        %v2628 = vsub.f32 %v2626, %v2627
        %v2629 = vand.u32 %v2628, 4294901760
        %2630 = vmatmul.f32.gmra.mxu0 %v2629
        %v2631 = vpop.f32.mrf.mxu0
        %v2632 = vadd.f32 %v1736, %v2631
        %v2633 = vand.u32 %v1753, 4294901760
        %v2634 = vsub.f32 %v1753, %v2633
        %v2635 = vand.u32 %v2634, 4294901760
        %v2636 = vsub.f32 %v2634, %v2635
        %v2637 = vand.u32 %v2636, 4294901760
        %2638 = vmatmul.f32.gmra.mxu0 %v2637
        %v2639 = vpop.f32.mrf.mxu0
        %v2640 = vadd.f32 %v1741, %v2639
        %2641 = vdwg.mxu0
        %2642 = vmatpush.msra.mxu0 0.0
        %2643 = vmatpush.msra.mxu0 0.0
        %2644 = vmatpush.msra.mxu0 0.0
        %2645 = vmatpush.msra.mxu0 0.0
        %2646 = vmatpush.msra.mxu0 0.0
        %2647 = vmatpush.msra.mxu0 0.0
        %2648 = vmatpush.msra.mxu0 0.0
        %2649 = vmatpush.msra.mxu0 0.0
        %2650 = vmatpush.msra.mxu0 0.0
        %2651 = vmatpush.msra.mxu0 0.0
        %2652 = vmatpush.msra.mxu0 0.0
        %2653 = vmatpush.msra.mxu0 0.0
        %v2654 = vand.u32 %v1718, 4294901760
        %v2655 = vsub.f32 %v1718, %v2654
        %v2656 = vand.u32 %v2655, 4294901760
        %v2657 = vsub.f32 %v2655, %v2656
        %v2658 = vand.u32 %v2657, 4294901760
        %2659 = vmatpush.msra.mxu0 %v2658
        %v2660 = vand.u32 %v1714, 4294901760
        %v2661 = vsub.f32 %v1714, %v2660
        %v2662 = vand.u32 %v2661, 4294901760
        %v2663 = vsub.f32 %v2661, %v2662
        %v2664 = vand.u32 %v2663, 4294901760
        %2665 = vmatpush.msra.mxu0 %v2664
        %v2666 = vand.u32 %v1710, 4294901760
        %v2667 = vsub.f32 %v1710, %v2666
        %v2668 = vand.u32 %v2667, 4294901760
        %v2669 = vsub.f32 %v2667, %v2668
        %v2670 = vand.u32 %v2669, 4294901760
        %2671 = vmatpush.msra.mxu0 %v2670
        %v2672 = vand.u32 %v1706, 4294901760
        %v2673 = vsub.f32 %v1706, %v2672
        %v2674 = vand.u32 %v2673, 4294901760
        %v2675 = vsub.f32 %v2673, %v2674
        %v2676 = vand.u32 %v2675, 4294901760
        %2677 = vmatpush.msra.mxu0 %v2676
        %v2678 = vand.u32 %v1744, 4294901760
        %2679 = vmatmul.f32.gmra.mxu0 %v2678
        %v2680 = vpop.f32.mrf.mxu0
        %v2681 = vadd.f32 %v2616, %v2680
        %v2682 = vand.u32 %v1747, 4294901760
        %2683 = vmatmul.f32.gmra.mxu0 %v2682
        %v2684 = vpop.f32.mrf.mxu0
        %v2685 = vadd.f32 %v2624, %v2684
        %v2686 = vand.u32 %v1750, 4294901760
        %2687 = vmatmul.f32.gmra.mxu0 %v2686
        %v2688 = vpop.f32.mrf.mxu0
        %v2689 = vadd.f32 %v2632, %v2688
        %v2690 = vand.u32 %v1753, 4294901760
        %2691 = vmatmul.f32.gmra.mxu0 %v2690
        %v2692 = vpop.f32.mrf.mxu0
        %v2693 = vadd.f32 %v2640, %v2692
        %2694 = vdwg.mxu0
        %2695 = vmatpush.msra.mxu0 0.0
        %2696 = vmatpush.msra.mxu0 0.0
        %2697 = vmatpush.msra.mxu0 0.0
        %2698 = vmatpush.msra.mxu0 0.0
        %2699 = vmatpush.msra.mxu0 0.0
        %2700 = vmatpush.msra.mxu0 0.0
        %2701 = vmatpush.msra.mxu0 0.0
        %2702 = vmatpush.msra.mxu0 0.0
        %2703 = vmatpush.msra.mxu0 0.0
        %2704 = vmatpush.msra.mxu0 0.0
        %2705 = vmatpush.msra.mxu0 0.0
        %2706 = vmatpush.msra.mxu0 0.0
        %v2707 = vand.u32 %v1718, 4294901760
        %v2708 = vsub.f32 %v1718, %v2707
        %2709 = vmatpush.msra.mxu0 %v2708
        %v2710 = vand.u32 %v1714, 4294901760
        %v2711 = vsub.f32 %v1714, %v2710
        %2712 = vmatpush.msra.mxu0 %v2711
        %v2713 = vand.u32 %v1710, 4294901760
        %v2714 = vsub.f32 %v1710, %v2713
        %2715 = vmatpush.msra.mxu0 %v2714
        %v2716 = vand.u32 %v1706, 4294901760
        %v2717 = vsub.f32 %v1706, %v2716
        %2718 = vmatpush.msra.mxu0 %v2717
        %v2719 = vand.u32 %v1744, 4294901760
        %v2720 = vsub.f32 %v1744, %v2719
        %2721 = vmatmul.f32.gmra.mxu0 %v2720
        %v2722 = vpop.f32.mrf.mxu0
        %v2723 = vadd.f32 %v2681, %v2722
        %v2724 = vand.u32 %v1747, 4294901760
        %v2725 = vsub.f32 %v1747, %v2724
        %2726 = vmatmul.f32.gmra.mxu0 %v2725
        %v2727 = vpop.f32.mrf.mxu0
        %v2728 = vadd.f32 %v2685, %v2727
        %v2729 = vand.u32 %v1750, 4294901760
        %v2730 = vsub.f32 %v1750, %v2729
        %2731 = vmatmul.f32.gmra.mxu0 %v2730
        %v2732 = vpop.f32.mrf.mxu0
        %v2733 = vadd.f32 %v2689, %v2732
        %v2734 = vand.u32 %v1753, 4294901760
        %v2735 = vsub.f32 %v1753, %v2734
        %2736 = vmatmul.f32.gmra.mxu0 %v2735
        %v2737 = vpop.f32.mrf.mxu0
        %v2738 = vadd.f32 %v2693, %v2737
        %2739 = vdwg.mxu0
        %2740 = vmatpush.msra.mxu0 0.0
        %2741 = vmatpush.msra.mxu0 0.0
        %2742 = vmatpush.msra.mxu0 0.0
        %2743 = vmatpush.msra.mxu0 0.0
        %2744 = vmatpush.msra.mxu0 0.0
        %2745 = vmatpush.msra.mxu0 0.0
        %2746 = vmatpush.msra.mxu0 0.0
        %2747 = vmatpush.msra.mxu0 0.0
        %2748 = vmatpush.msra.mxu0 0.0
        %2749 = vmatpush.msra.mxu0 0.0
        %2750 = vmatpush.msra.mxu0 0.0
        %2751 = vmatpush.msra.mxu0 0.0
        %v2752 = vand.u32 %v1718, 4294901760
        %2753 = vmatpush.msra.mxu0 %v2752
        %v2754 = vand.u32 %v1714, 4294901760
        %2755 = vmatpush.msra.mxu0 %v2754
        %v2756 = vand.u32 %v1710, 4294901760
        %2757 = vmatpush.msra.mxu0 %v2756
        %v2758 = vand.u32 %v1706, 4294901760
        %2759 = vmatpush.msra.mxu0 %v2758
        %v2760 = vand.u32 %v1744, 4294901760
        %v2761 = vsub.f32 %v1744, %v2760
        %v2762 = vand.u32 %v2761, 4294901760
        %2763 = vmatmul.f32.gmra.mxu0 %v2762
        %v2764 = vpop.f32.mrf.mxu0
        %v2765 = vadd.f32 %v2723, %v2764
        %v2766 = vand.u32 %v1747, 4294901760
        %v2767 = vsub.f32 %v1747, %v2766
        %v2768 = vand.u32 %v2767, 4294901760
        %2769 = vmatmul.f32.gmra.mxu0 %v2768
        %v2770 = vpop.f32.mrf.mxu0
        %v2771 = vadd.f32 %v2728, %v2770
        %v2772 = vand.u32 %v1750, 4294901760
        %v2773 = vsub.f32 %v1750, %v2772
        %v2774 = vand.u32 %v2773, 4294901760
        %2775 = vmatmul.f32.gmra.mxu0 %v2774
        %v2776 = vpop.f32.mrf.mxu0
        %v2777 = vadd.f32 %v2733, %v2776
        %v2778 = vand.u32 %v1753, 4294901760
        %v2779 = vsub.f32 %v1753, %v2778
        %v2780 = vand.u32 %v2779, 4294901760
        %2781 = vmatmul.f32.gmra.mxu0 %v2780
        %v2782 = vpop.f32.mrf.mxu0
        %v2783 = vadd.f32 %v2738, %v2782
        %2784 = vdwg.mxu0
        %2785 = vmatpush.msra.mxu0 0.0
        %2786 = vmatpush.msra.mxu0 0.0
        %2787 = vmatpush.msra.mxu0 0.0
        %2788 = vmatpush.msra.mxu0 0.0
        %2789 = vmatpush.msra.mxu0 0.0
        %2790 = vmatpush.msra.mxu0 0.0
        %2791 = vmatpush.msra.mxu0 0.0
        %2792 = vmatpush.msra.mxu0 0.0
        %2793 = vmatpush.msra.mxu0 0.0
        %2794 = vmatpush.msra.mxu0 0.0
        %2795 = vmatpush.msra.mxu0 0.0
        %2796 = vmatpush.msra.mxu0 0.0
        %v2797 = vand.u32 %v1718, 4294901760
        %v2798 = vsub.f32 %v1718, %v2797
        %v2799 = vand.u32 %v2798, 4294901760
        %2800 = vmatpush.msra.mxu0 %v2799
        %v2801 = vand.u32 %v1714, 4294901760
        %v2802 = vsub.f32 %v1714, %v2801
        %v2803 = vand.u32 %v2802, 4294901760
        %2804 = vmatpush.msra.mxu0 %v2803
        %v2805 = vand.u32 %v1710, 4294901760
        %v2806 = vsub.f32 %v1710, %v2805
        %v2807 = vand.u32 %v2806, 4294901760
        %2808 = vmatpush.msra.mxu0 %v2807
        %v2809 = vand.u32 %v1706, 4294901760
        %v2810 = vsub.f32 %v1706, %v2809
        %v2811 = vand.u32 %v2810, 4294901760
        %2812 = vmatpush.msra.mxu0 %v2811
        %v2813 = vand.u32 %v1744, 4294901760
        %2814 = vmatmul.f32.gmra.mxu0 %v2813
        %v2815 = vpop.f32.mrf.mxu0
        %v2816 = vadd.f32 %v2765, %v2815
        %v2817 = vand.u32 %v1747, 4294901760
        %2818 = vmatmul.f32.gmra.mxu0 %v2817
        %v2819 = vpop.f32.mrf.mxu0
        %v2820 = vadd.f32 %v2771, %v2819
        %v2821 = vand.u32 %v1750, 4294901760
        %2822 = vmatmul.f32.gmra.mxu0 %v2821
        %v2823 = vpop.f32.mrf.mxu0
        %v2824 = vadd.f32 %v2777, %v2823
        %v2825 = vand.u32 %v1753, 4294901760
        %2826 = vmatmul.f32.gmra.mxu0 %v2825
        %v2827 = vpop.f32.mrf.mxu0
        %v2828 = vadd.f32 %v2783, %v2827
        %2829 = vdwg.mxu0
        %2830 = vmatpush.msra.mxu0 0.0
        %2831 = vmatpush.msra.mxu0 0.0
        %2832 = vmatpush.msra.mxu0 0.0
        %2833 = vmatpush.msra.mxu0 0.0
        %2834 = vmatpush.msra.mxu0 0.0
        %2835 = vmatpush.msra.mxu0 0.0
        %2836 = vmatpush.msra.mxu0 0.0
        %2837 = vmatpush.msra.mxu0 0.0
        %2838 = vmatpush.msra.mxu0 0.0
        %2839 = vmatpush.msra.mxu0 0.0
        %2840 = vmatpush.msra.mxu0 0.0
        %2841 = vmatpush.msra.mxu0 0.0
        %v2842 = vand.u32 %v1718, 4294901760
        %2843 = vmatpush.msra.mxu0 %v2842
        %v2844 = vand.u32 %v1714, 4294901760
        %2845 = vmatpush.msra.mxu0 %v2844
        %v2846 = vand.u32 %v1710, 4294901760
        %2847 = vmatpush.msra.mxu0 %v2846
        %v2848 = vand.u32 %v1706, 4294901760
        %2849 = vmatpush.msra.mxu0 %v2848
        %v2850 = vand.u32 %v1744, 4294901760
        %2851 = vmatmul.f32.gmra.mxu0 %v2850
        %v2852 = vpop.f32.mrf.mxu0
        %v2853 = vadd.f32 %v2816, %v2852
        %v2854 = vand.u32 %v1747, 4294901760
        %2855 = vmatmul.f32.gmra.mxu0 %v2854
        %v2856 = vpop.f32.mrf.mxu0
        %v2857 = vadd.f32 %v2820, %v2856
        %v2858 = vand.u32 %v1750, 4294901760
        %2859 = vmatmul.f32.gmra.mxu0 %v2858
        %v2860 = vpop.f32.mrf.mxu0
        %v2861 = vadd.f32 %v2824, %v2860
        %v2862 = vand.u32 %v1753, 4294901760
        %2863 = vmatmul.f32.gmra.mxu0 %v2862
        %v2864 = vpop.f32.mrf.mxu0
        %v2865 = vadd.f32 %v2828, %v2864
        %2866 = vdwg.mxu0
        %v2867 = vtanh.pop %v2019
        %v2868 = vtanh.pop %v2297
        %v2869 = vtanh.pop %v2575
        %v2870 = vtanh.pop %v2853
        %v2871 = vtanh.pop %v2023
        %v2872 = vtanh.pop %v2301
        %v2873 = vtanh.pop %v2579
        %v2874 = vtanh.pop %v2857
        %v2875 = vtanh.pop %v2027
        %v2876 = vtanh.pop %v2305
        %v2877 = vtanh.pop %v2583
        %v2878 = vtanh.pop %v2861
        %v2879 = vtanh.pop %v2031
        %v2880 = vtanh.pop %v2309
        %v2881 = vtanh.pop %v2587
        %v2882 = vtanh.pop %v2865
        %2884 = vset.pattern.permute.xlu0 0
        %2885 = vperm.xlu0 %2884, %v384
        %v2886 = vpop.permute.xlu0 %2885
        %2889 = vset.pattern.permute.xlu0 0
        %2890 = vperm.xlu0 %2889, %v385
        %v2891 = vpop.permute.xlu0 %2890
        %2894 = vset.pattern.permute.xlu0 0
        %2895 = vperm.xlu0 %2894, %v386
        %v2896 = vpop.permute.xlu0 %2895
        %2899 = vset.pattern.permute.xlu0 0
        %2900 = vperm.xlu0 %2899, %v387
        %v2901 = vpop.permute.xlu0 %2900
        %v2903 = vmul.f32 %v2886, %v2867
        %v2904 = vmul.f32 %v2886, %v2868
        %v2905 = vmul.f32 %v2886, %v2869
        %v2906 = vmul.f32 %v2886, %v2870
        %v2907 = vmul.f32 %v2891, %v2871
        %v2908 = vmul.f32 %v2891, %v2872
        %v2909 = vmul.f32 %v2891, %v2873
        %v2910 = vmul.f32 %v2891, %v2874
        %v2911 = vmul.f32 %v2896, %v2875
        %v2912 = vmul.f32 %v2896, %v2876
        %v2913 = vmul.f32 %v2896, %v2877
        %v2914 = vmul.f32 %v2896, %v2878
        %v2915 = vmul.f32 %v2901, %v2879
        %v2916 = vmul.f32 %v2901, %v2880
        %v2917 = vmul.f32 %v2901, %v2881
        %v2918 = vmul.f32 %v2901, %v2882
        %v2919 = vadd.f32 %v2903, %v2907
        %v2920 = vadd.f32 %v2919, %v2911
        %v2921 = vadd.f32 %v2920, %v2915
        %v2922 = vrot.slane %v2921, 4
        %v2923 = vadd.f32 %v2921, %v2922
        %v2924 = vrot.slane %v2923, 2
        %v2925 = vadd.f32 %v2923, %v2924
        %v2926 = vrot.slane %v2925, 1
        %v2927 = vadd.f32 %v2925, %v2926
        %v2928 = vadd.f32 %v2904, %v2908
        %v2929 = vadd.f32 %v2928, %v2912
        %v2930 = vadd.f32 %v2929, %v2916
        %v2931 = vrot.slane %v2930, 4
        %v2932 = vadd.f32 %v2930, %v2931
        %v2933 = vrot.slane %v2932, 2
        %v2934 = vadd.f32 %v2932, %v2933
        %v2935 = vrot.slane %v2934, 1
        %v2936 = vadd.f32 %v2934, %v2935
        %v2937 = vadd.f32 %v2905, %v2909
        %v2938 = vadd.f32 %v2937, %v2913
        %v2939 = vadd.f32 %v2938, %v2917
        %v2940 = vrot.slane %v2939, 4
        %v2941 = vadd.f32 %v2939, %v2940
        %v2942 = vrot.slane %v2941, 2
        %v2943 = vadd.f32 %v2941, %v2942
        %v2944 = vrot.slane %v2943, 1
        %v2945 = vadd.f32 %v2943, %v2944
        %v2946 = vadd.f32 %v2906, %v2910
        %v2947 = vadd.f32 %v2946, %v2914
        %v2948 = vadd.f32 %v2947, %v2918
        %v2949 = vrot.slane %v2948, 4
        %v2950 = vadd.f32 %v2948, %v2949
        %v2951 = vrot.slane %v2950, 2
        %v2952 = vadd.f32 %v2950, %v2951
        %v2953 = vrot.slane %v2952, 1
        %v2954 = vadd.f32 %v2952, %v2953
        %2956 = vset.pattern.permute.xlu0 0
        %2957 = vperm.xlu0 %2956, %v388
        %v2958 = vpop.permute.xlu0 %2957
        %v2960 = vperm.slane %v2958, 0
        %v2961 = vadd.f32 %v2927, %v2960
        %v2962 = vadd.f32 %v2936, %v2960
        %v2963 = vadd.f32 %v2945, %v2960
        %v2964 = vadd.f32 %v2954, %v2960
        %v2969 = vrot.slane %v2962, 7
        %v2970 = vrot.slane %v2963, 6
        %v2971 = vrot.slane %v2964, 5
        %vm2972 = vcmask 1040384
        %v2973 = vsel %vm2972, %v2961, %v2969
        %vm2974 = vcmask 1042434
        %v2975 = vsel %vm2974, %v2970, %v2971
        %vm2976 = vcmask 1041408
        %v2977 = vsel %vm2976, %v2973, %v2975
        %v2979 = vlaneseq
        %vm2980 = vcmp.ge.s32.totalorder %v2979, 0
        %vm2981 = vcmp.lt.s32.totalorder %v2979, 512
        %vm2982 = vmand %vm2980, %vm2981
        %2983 = vst.msk [vmem:[%s355] sm:$0xf] %vm2982, %v2977
        %s2984 = sand.u32 %s249, 1
        %s2985 = scalar_lea.sflag [#allocation4], %s2984
        %s2986 = sand.u32 %s249, 1
        %s2987 = smul.addr %s2986, 4
        %s2988 = scalar_lea.vmem [#allocation3], %s2987
        // Predicated region
        $region61: #{tpu_custom_call.1} parent=59 // pred_check
          %p2989 = pneg %p259
        $region62: #{tpu_custom_call.1} parent=59 // pred_check_branch
          %2991 = sbr.rel (%p2989) target = $region64
        $region63: #{tpu_custom_call.1} parent=59 // pred_region
          %s2992 = smul.u32 4, %s26
          %2994 = vsyncadd %s2985, 0
          %s2995 = scalar_lea.hbm %s10, %s2992
          %s2997 = sshll.u32 %s2988, 4
          %s2998 = int_to_ptr.vmem [resolvable:$true] %s2997
          %s2999 = sshll.u32 %s2995, 4
          %s3000 = int_to_ptr.hbm [resolvable:$true] %s2999
          %3002 = dma.vmem_to_hbm [thread:$0]  %s2998, 64, %s3000, %s2985
        $region64: #{tpu_custom_call.1} parent=59 // pred_fallthru
          _
      $region60: #{tpu_custom_call.1} parent=5 // pred_fallthru
        _
      %p3003 = scmp.le.s32.totalorder 2, %s21
      // Predicated region
      $region65: #{tpu_custom_call.1} parent=5 // pred_check
        %p3004 = pneg %p3003
      $region66: #{tpu_custom_call.1} parent=5 // pred_check_branch
        %3006 = sbr.rel (%p3004) target = $region68
      $region67: #{tpu_custom_call.1} parent=5 // pred_region
        %s3007 = ssub.s32 %s21, 2
        // Predicated region
        $region69: #{tpu_custom_call.1} parent=67 // pred_check
          %p3008 = pneg %p265
        $region70: #{tpu_custom_call.1} parent=67 // pred_check_branch
          %3010 = sbr.rel (%p3008) target = $region72
        $region71: #{tpu_custom_call.1} parent=67 // pred_region
          %s3011 = sand.u32 %s250, 1
          %s3012 = scalar_lea.sflag [#allocation4], %s3011
          %s3013 = sand.u32 %s250, 1
          %s3014 = smul.addr %s3013, 4
          %s3015 = scalar_lea.vmem [#allocation3], %s3014
          %3017 = dma.done %s3012, 64
        $region72: #{tpu_custom_call.1} parent=67 // pred_fallthru
          _
      $region68: #{tpu_custom_call.1} parent=5 // pred_fallthru
        _
    $region6: #{tpu_custom_call.1} parent=1 // loop_footer
      %s25 = sadd.s32 1, %s21
    $region7: #{tpu_custom_call.1} parent=1 // loop_footer_branch
      %20 = sbr.rel target = $region3
    $region8: #{tpu_custom_call.1} parent=1 // loop_exit
      _
    %3018 = vsyncpa [#allocation4], 1
    %s3019 = scalar_lea.sflag [#allocation4], 1
    %3020 = vsyncpa %s3019, 1

</llo_original>
